<compile_context>
chip_gen: v7x
topology: tpu7x:2x2x1
jax: 0.10.0
libtpu: 0.0.40
codegen_flags: <defaults>
</compile_context>

<pallas_src>
import functools

import jax
import jax.numpy as jnp
import numpy as np
from jax import lax
from jax.experimental import pallas as pl
from jax.experimental.pallas import tpu as pltpu


def _decode_from_x_kernel(xr_ref, xc_ref, ni_ref, nj_ref, o_ref, *,
                          C, b, remove_diagonal):
    """One (tm, tn) output tile of adj = sigmoid(C * ||x_i - x_j||^2 + b)."""
    xi = xr_ref[...].astype(jnp.float32)                 # (tm, d) row block
    xj = xc_ref[...].astype(jnp.float32)                 # (tn, d) col block

    # Gram term on the MXU: contract last dim of both operands (A * B^T form),
    # f32 accumulation, highest precision to limit cancellation error in d2.
    g = lax.dot_general(
        xi, xj,
        dimension_numbers=(((1,), (1,)), ((), ())),
        preferred_element_type=jnp.float32,
        precision=lax.Precision.HIGHEST)                  # (tm, tn)

    ni = ni_ref[...]                                      # (tm, 1)  f32
    nj = nj_ref[...]                                      # (1, tn)  f32

    # ||xi - xj||^2, clamped (Gram cancellation can go slightly negative).
    d2 = jnp.maximum(ni + nj - 2.0 * g, 0.0)              # (tm, tn)
    z = C * d2 + b
    # sigmoid(z) == 0.5 * (tanh(z/2) + 1): routes to the EUP tanh unit.
    adj = 0.5 * (jnp.tanh(0.5 * z) + 1.0)

    o_ref[...] = adj.astype(o_ref.dtype)

    if remove_diagonal:
        # Only diagonal tiles (i == j, square tiles) contain diagonal entries.
        @pl.when(pl.program_id(0) == pl.program_id(1))
        def _():
            tm, tn = o_ref.shape
            row = lax.broadcasted_iota(jnp.int32, (tm, tn), 0)
            col = lax.broadcasted_iota(jnp.int32, (tm, tn), 1)
            o_ref[...] = jnp.where(row == col,
                                   jnp.zeros_like(adj),
                                   adj).astype(o_ref.dtype)


def _pick_tile(n_pad, max_tile):
    """Largest tile in {512,256,128} (<= max_tile) dividing n_pad exactly,
    preferring >= 2 blocks per grid axis so both v7x TensorCores get work."""
    candidates = [t for t in (512, 256, 128) if t <= max_tile]
    for t in candidates:
        if n_pad % t == 0 and n_pad // t >= 2:
            return t
    for t in candidates:
        if n_pad % t == 0:
            return t
    return 128


def decode_from_x(x, C=10.0, b=-1.0, remove_diagonal=True,
                  out_dtype=jnp.float32, max_tile=512):
    """Pallas wrapper. x: (n_nodes, hidden_dim) -> (n_nodes, n_nodes).

    out_dtype=jnp.bfloat16 halves output HBM traffic (kernel is write-bound)
    when the consumer of adj tolerates it; math is always f32 in-kernel.
    """
    n, d = x.shape

    # Pad n up to a multiple of 128 (lane-dense output tiles). Tile is chosen
    # to divide n_pad exactly, so there is no second round-up.
    n_pad = max(128, pl.cdiv(n, 128) * 128)
    tile = _pick_tile(n_pad, max_tile)

    if n_pad != n:
        x_p = jnp.zeros((n_pad, d), x.dtype).at[:n, :].set(x)
    else:
        x_p = x

    # Squared row norms, computed once in the wrapper (not per grid step).
    xf = x_p.astype(jnp.float32)
    sq_row = jnp.sum(xf * xf, axis=-1, keepdims=True)        # (n_pad, 1)
    sq_col = sq_row.reshape(1, n_pad)                        # (1, n_pad)

    grid = (n_pad // tile, n_pad // tile)
    kernel = functools.partial(
        _decode_from_x_kernel, C=float(C), b=float(b),
        remove_diagonal=remove_diagonal)

    out_bytes = jnp.dtype(out_dtype).itemsize
    cost = pl.CostEstimate(
        flops=2 * n_pad * n_pad * d,
        transcendentals=n_pad * n_pad,
        bytes_accessed=4 * 2 * n_pad * (d + 1) + out_bytes * n_pad * n_pad,
    )

    out = pl.pallas_call(
        kernel,
        out_shape=jax.ShapeDtypeStruct((n_pad, n_pad), out_dtype),
        grid_spec=pltpu.PrefetchScalarGridSpec(
            num_scalar_prefetch=0,
            grid=grid,
            in_specs=[
                # Row block of x, indexed by grid axis i.
                pl.BlockSpec((tile, d), lambda i, j: (i, 0)),
                # Column block of x, indexed by grid axis j.
                pl.BlockSpec((tile, d), lambda i, j: (j, 0)),
                # Precomputed squared norms: rows (sublane-oriented) and
                # columns (already lane-oriented -> no in-kernel transpose).
                pl.BlockSpec((tile, 1), lambda i, j: (i, 0)),
                pl.BlockSpec((1, tile), lambda i, j: (0, j)),
            ],
            out_specs=pl.BlockSpec((tile, tile), lambda i, j: (i, j)),
        ),
        compiler_params=pltpu.CompilerParams(
            dimension_semantics=("parallel", "parallel")),
        cost_estimate=cost,
    )(x_p, x_p, sq_row, sq_col)

    # Only slice when padding was actually introduced (avoids a full n^2
    # read+write copy when n is already a multiple of 128).
    if n_pad != n:
        out = out[:n, :n]
    return out


def decode_from_x_ref(x, C=10.0, b=-1.0, remove_diagonal=True):
    """Pure-JAX reference mirroring the PyTorch code line by line."""
    n = x.shape[0]
    x_a = x[None, :, :]              # unsqueeze(0)
    x_b = jnp.transpose(x_a, (1, 0, 2))
    X = (x_a - x_b) ** 2
    X = X.reshape(n * n, -1)
    X = jax.nn.sigmoid(C * jnp.sum(X, axis=1) + b)
    adj = X.reshape(n, n)
    if remove_diagonal:
        adj = adj * (1.0 - jnp.eye(n, dtype=adj.dtype))
    return adj


def ae_parent_forward(x, C=10.0, b=-1.0):
    """AE_parent.forward analogue.

    encode() / decode() are abstract (`pass`) in the parent class, so the
    latent `x` is taken as given and decode_from_x provides the adjacency.
    """
    # TODO(synk): encode()/decode() are abstract in AE_parent; no compute to port.
    adj_pred = decode_from_x(x, C=C, b=b, remove_diagonal=True)
    return adj_pred, x


if __name__ == "__main__":
    key = jax.random.PRNGKey(0)

    # Case 1: small shape consistent with the module interface (n=16, d=32).
    n_nodes, hidden_dim = 16, 32
    x = jax.random.normal(key, (n_nodes, hidden_dim), dtype=jnp.float32)

    adj_pred, x_out = ae_parent_forward(x, C=10.0, b=-1.0)
    adj_pred = jax.block_until_ready(adj_pred)

    adj_ref = decode_from_x_ref(x, C=10.0, b=-1.0, remove_diagonal=True)
    np.testing.assert_allclose(np.asarray(adj_pred), np.asarray(adj_ref),
                               rtol=1e-5, atol=2e-5)
    assert adj_pred.shape == (n_nodes, n_nodes)
    assert x_out.shape == (n_nodes, hidden_dim)

    # Case 2: non-multiple-of-128 n exercises padding, the 2x2 grid, and the
    # pl.when-gated diagonal masking on diagonal tiles only.
    key2 = jax.random.PRNGKey(1)
    n2, d2 = 200, 32
    x2 = jax.random.normal(key2, (n2, d2), dtype=jnp.float32)
    adj2 = jax.block_until_ready(
        decode_from_x(x2, C=10.0, b=-1.0, remove_diagonal=True))
    adj2_ref = decode_from_x_ref(x2, C=10.0, b=-1.0, remove_diagonal=True)
    np.testing.assert_allclose(np.asarray(adj2), np.asarray(adj2_ref),
                               rtol=1e-5, atol=2e-5)
    assert adj2.shape == (n2, n2)

    # Case 3: n a multiple of 128 exercises the no-padding / no-slice path.
    key3 = jax.random.PRNGKey(2)
    n3, d3 = 256, 16
    x3 = jax.random.normal(key3, (n3, d3), dtype=jnp.float32)
    adj3 = jax.block_until_ready(
        decode_from_x(x3, C=10.0, b=-1.0, remove_diagonal=True))
    adj3_ref = decode_from_x_ref(x3, C=10.0, b=-1.0, remove_diagonal=True)
    np.testing.assert_allclose(np.asarray(adj3), np.asarray(adj3_ref),
                               rtol=1e-5, atol=2e-5)
    assert adj3.shape == (n3, n3)

    print("KERNEL_OK")
</pallas_src>

<mosaic_0001>
module attributes {stable_mosaic.version = 11 : i64} {
  func.func @_decode_from_x_kernel(%arg0: i32, %arg1: i32, %arg2: memref<128x32xf32, #tpu.memory_space<vmem>>, %arg3: memref<128x32xf32, #tpu.memory_space<vmem>>, %arg4: memref<128x1xf32, #tpu.memory_space<vmem>>, %arg5: memref<1x128xf32, #tpu.memory_space<vmem>>, %arg6: memref<128x128xf32, #tpu.memory_space<vmem>>) attributes {dimension_semantics = [#tpu.dimension_semantics<parallel>, #tpu.dimension_semantics<parallel>], iteration_bounds = array<i64: 1, 1>, scalar_prefetch = 0 : i64, scratch_operands = 0 : i64, tpu.core_type = #tpu.core_type<tc>, window_params = [{transform_indices = @transform_0, window_bounds = array<i64: 128, 32>}, {transform_indices = @transform_1, window_bounds = array<i64: 128, 32>}, {transform_indices = @transform_2, window_bounds = array<i64: 128, 1>}, {transform_indices = @transform_3, window_bounds = array<i64: 1, 128>}, {transform_indices = @transform_4, window_bounds = array<i64: 128, 128>}]} {
    %c0 = arith.constant 0 : index
    %c0_0 = arith.constant 0 : index
    %0 = vector.load %arg2[%c0, %c0_0] : memref<128x32xf32, #tpu.memory_space<vmem>>, vector<128x32xf32>
    %c0_1 = arith.constant 0 : index
    %c0_2 = arith.constant 0 : index
    %1 = vector.load %arg3[%c0_1, %c0_2] : memref<128x32xf32, #tpu.memory_space<vmem>>, vector<128x32xf32>
    %cst = arith.constant dense<0.000000e+00> : vector<128x128xf32>
    %2 = tpu.matmul %0, %1, %cst {dimension_numbers = #tpu.dot_dimension_numbers<[1], [1], [0], [0], [0, 0, 1, 0], [], []>, precision = #tpu.contract_precision<fp32>} : vector<128x32xf32>, vector<128x32xf32>, vector<128x128xf32> -> vector<128x128xf32>
    %c0_3 = arith.constant 0 : index
    %c0_4 = arith.constant 0 : index
    %3 = vector.load %arg4[%c0_3, %c0_4] : memref<128x1xf32, #tpu.memory_space<vmem>>, vector<128x1xf32>
    %c0_5 = arith.constant 0 : index
    %c0_6 = arith.constant 0 : index
    %4 = vector.load %arg5[%c0_5, %c0_6] : memref<1x128xf32, #tpu.memory_space<vmem>>, vector<1x128xf32>
    %5 = vector.broadcast %3 : vector<128x1xf32> to vector<128x128xf32>
    %6 = vector.broadcast %4 : vector<1x128xf32> to vector<128x128xf32>
    %7 = arith.addf %5, %6 : vector<128x128xf32>
    %cst_7 = arith.constant 2.000000e+00 : f32
    %8 = vector.broadcast %cst_7 : f32 to vector<128x128xf32>
    %9 = arith.mulf %8, %2 : vector<128x128xf32>
    %10 = arith.subf %7, %9 : vector<128x128xf32>
    %cst_8 = arith.constant 0.000000e+00 : f32
    %11 = vector.broadcast %cst_8 : f32 to vector<128x128xf32>
    %12 = arith.maximumf %10, %11 : vector<128x128xf32>
    %cst_9 = arith.constant 1.000000e+01 : f32
    %13 = vector.broadcast %cst_9 : f32 to vector<128x128xf32>
    %14 = arith.mulf %13, %12 : vector<128x128xf32>
    %cst_10 = arith.constant -1.000000e+00 : f32
    %15 = vector.broadcast %cst_10 : f32 to vector<128x128xf32>
    %16 = arith.addf %14, %15 : vector<128x128xf32>
    %cst_11 = arith.constant 5.000000e-01 : f32
    %17 = vector.broadcast %cst_11 : f32 to vector<128x128xf32>
    %18 = arith.mulf %17, %16 : vector<128x128xf32>
    %19 = math.tanh %18 : vector<128x128xf32>
    %cst_12 = arith.constant 1.000000e+00 : f32
    %20 = vector.broadcast %cst_12 : f32 to vector<128x128xf32>
    %21 = arith.addf %19, %20 : vector<128x128xf32>
    %cst_13 = arith.constant 5.000000e-01 : f32
    %22 = vector.broadcast %cst_13 : f32 to vector<128x128xf32>
    %23 = arith.mulf %22, %21 : vector<128x128xf32>
    %c0_14 = arith.constant 0 : index
    %c0_15 = arith.constant 0 : index
    %24 = vector.load %arg6[%c0_14, %c0_15] : memref<128x128xf32, #tpu.memory_space<vmem>>, vector<128x128xf32>
    tpu.vector_store %arg6[%c0_14, %c0_15], %23 {strides = array<i32>} : memref<128x128xf32, #tpu.memory_space<vmem>>, vector<128x128xf32>,
    %25 = arith.cmpi eq, %arg0, %arg1 : i32
    %26 = arith.extui %25 : i1 to i32
    %c0_i32 = arith.constant 0 : i32
    %27 = arith.cmpi ne, %26, %c0_i32 : i32
    scf.if %27 {
      %28 = tpu.iota {dimensions = array<i32: 0>} : vector<128x128xi32>
      %29 = tpu.iota {dimensions = array<i32: 1>} : vector<128x128xi32>
      %30 = arith.cmpi eq, %28, %29 : vector<128x128xi32>
      %cst_16 = arith.constant 0.000000e+00 : f32
      %31 = vector.broadcast %cst_16 : f32 to vector<128x128xf32>
      %32 = arith.select %30, %31, %23 : vector<128x128xi1>, vector<128x128xf32>
      %c0_17 = arith.constant 0 : index
      %c0_18 = arith.constant 0 : index
      %33 = vector.load %arg6[%c0_17, %c0_18] : memref<128x128xf32, #tpu.memory_space<vmem>>, vector<128x128xf32>
      tpu.vector_store %arg6[%c0_17, %c0_18], %32 {strides = array<i32>} : memref<128x128xf32, #tpu.memory_space<vmem>>, vector<128x128xf32>,
    } else {
    }
    return
  }
  func.func @transform_0(%arg0: i32, %arg1: i32) -> (i32, i32) {
    %c0_i32 = arith.constant 0 : i32
    %c0_i32_0 = arith.constant 0 : i32
    return %arg0, %c0_i32 : i32, i32
  }
  func.func @transform_1(%arg0: i32, %arg1: i32) -> (i32, i32) {
    %c0_i32 = arith.constant 0 : i32
    %c0_i32_0 = arith.constant 0 : i32
    return %arg1, %c0_i32 : i32, i32
  }
  func.func @transform_2(%arg0: i32, %arg1: i32) -> (i32, i32) {
    %c0_i32 = arith.constant 0 : i32
    %c0_i32_0 = arith.constant 0 : i32
    return %arg0, %c0_i32 : i32, i32
  }
  func.func @transform_3(%arg0: i32, %arg1: i32) -> (i32, i32) {
    %c0_i32 = arith.constant 0 : i32
    %c0_i32_0 = arith.constant 0 : i32
    return %c0_i32, %arg1 : i32, i32
  }
  func.func @transform_4(%arg0: i32, %arg1: i32) -> (i32, i32) {
    %c0_i32 = arith.constant 0 : i32
    return %arg0, %arg1 : i32, i32
  }
}

</mosaic_0001>

<llo_original>
// kernel: tpu_custom_call.1
$region0: #{tpu_custom_call.1}
  #allocation0 [shape = 'u32[]', space=smem, size = 0x4, offset = 0x4, fixed_abs, tag = 'smem constant byte address 0x4 - core index']
  #allocation1 [shape = 'u32[144,128]{1,0:T(1,128)}', space=vmem, size = 0x12000, scoped, tag = 'internal scratch']
  %s0 = inlined_call_operand.vmem [shape: f32[128,32], index: 0, kind: input, shape index: {}]
  %s1 = inlined_call_operand.vmem [shape: f32[128,32], index: 1, kind: input, shape index: {}]
  %s2 = inlined_call_operand.vmem [shape: f32[128,1], index: 2, kind: input, shape index: {}]
  %s3 = inlined_call_operand.vmem [shape: f32[1,128], index: 3, kind: input, shape index: {}]
  %s4 = inlined_call_operand.hbm [shape: f32[128,128], index: 4, kind: output, shape index: {}]
  %s5 = sld [smem:[#allocation0]]
  $region30: #{tpu_custom_call.1} parent=0
    _
  %s7 = ssub.s32 1, %s5
  %s8 = scalar_select 0, %s7, %s5
  $region1: #{tpu_custom_call.1} parent=0
    #allocation2 [shape = 'u8[65536]{0}', space=vmem, size = 0x10000, scoped, tag = 'output window, operand 0, single buffered']
    #allocation3 [shape = 's32[1]{0}', space=sflag, size = 0x4, scoped, tag = 'scoped memory for tpu_custom_call.1']
    %9 = vsyncpa [#allocation3], 0
    // Predicated region
    $region2: #{tpu_custom_call.1} parent=1 // pred_check
      _
    $region3: #{tpu_custom_call.1} parent=1 // pred_check_branch
      %11 = sbr.rel (0) target = $region5
    $region4: #{tpu_custom_call.1} parent=1 // pred_region
      _
    $region5: #{tpu_custom_call.1} parent=1 // pred_fallthru
      _
    // Predicated region
    $region6: #{tpu_custom_call.1} parent=1 // pred_check
      _
    $region7: #{tpu_custom_call.1} parent=1 // pred_check_branch
      %13 = sbr.rel (0) target = $region9
    $region8: #{tpu_custom_call.1} parent=1 // pred_region
      _
    $region9: #{tpu_custom_call.1} parent=1 // pred_fallthru
      _
    // Predicated region
    $region10: #{tpu_custom_call.1} parent=1 // pred_check
      _
    $region11: #{tpu_custom_call.1} parent=1 // pred_check_branch
      %15 = sbr.rel (0) target = $region13
    $region12: #{tpu_custom_call.1} parent=1 // pred_region
      _
    $region13: #{tpu_custom_call.1} parent=1 // pred_fallthru
      _
    // Predicated region
    $region14: #{tpu_custom_call.1} parent=1 // pred_check
      _
    $region15: #{tpu_custom_call.1} parent=1 // pred_check_branch
      %17 = sbr.rel (0) target = $region17
    $region16: #{tpu_custom_call.1} parent=1 // pred_region
      _
    $region17: #{tpu_custom_call.1} parent=1 // pred_fallthru
      _
    %v18 = vld [vmem:[%s0] sm:$0xff]
    %v19 = vld [vmem:[%s0 + $0x8] sm:$0xff]
    %v20 = vld [vmem:[%s0 + $0x10] sm:$0xff]
    %v21 = vld [vmem:[%s0 + $0x18] sm:$0xff]
    %v22 = vld [vmem:[%s0 + $0x20] sm:$0xff]
    %v23 = vld [vmem:[%s0 + $0x28] sm:$0xff]
    %v24 = vld [vmem:[%s0 + $0x30] sm:$0xff]
    %v25 = vld [vmem:[%s0 + $0x38] sm:$0xff]
    %v26 = vld [vmem:[%s0 + $0x40] sm:$0xff]
    %v27 = vld [vmem:[%s0 + $0x48] sm:$0xff]
    %v28 = vld [vmem:[%s0 + $0x50] sm:$0xff]
    %v29 = vld [vmem:[%s0 + $0x58] sm:$0xff]
    %v30 = vld [vmem:[%s0 + $0x60] sm:$0xff]
    %v31 = vld [vmem:[%s0 + $0x68] sm:$0xff]
    %v32 = vld [vmem:[%s0 + $0x70] sm:$0xff]
    %v33 = vld [vmem:[%s0 + $0x78] sm:$0xff]
    %v34 = vld [vmem:[%s1] sm:$0xff]
    %v35 = vld [vmem:[%s1 + $0x8] sm:$0xff]
    %v36 = vld [vmem:[%s1 + $0x10] sm:$0xff]
    %v37 = vld [vmem:[%s1 + $0x18] sm:$0xff]
    %v38 = vld [vmem:[%s1 + $0x20] sm:$0xff]
    %v39 = vld [vmem:[%s1 + $0x28] sm:$0xff]
    %v40 = vld [vmem:[%s1 + $0x30] sm:$0xff]
    %v41 = vld [vmem:[%s1 + $0x38] sm:$0xff]
    %v42 = vld [vmem:[%s1 + $0x40] sm:$0xff]
    %v43 = vld [vmem:[%s1 + $0x48] sm:$0xff]
    %v44 = vld [vmem:[%s1 + $0x50] sm:$0xff]
    %v45 = vld [vmem:[%s1 + $0x58] sm:$0xff]
    %v46 = vld [vmem:[%s1 + $0x60] sm:$0xff]
    %v47 = vld [vmem:[%s1 + $0x68] sm:$0xff]
    %v48 = vld [vmem:[%s1 + $0x70] sm:$0xff]
    %v49 = vld [vmem:[%s1 + $0x78] sm:$0xff]
    %vm50 = vcmask 261120
    %v52 = vsel %vm50, %v18, 0
    %v55 = vsel %vm50, %v19, 0
    %v58 = vsel %vm50, %v20, 0
    %v61 = vsel %vm50, %v21, 0
    %v64 = vsel %vm50, %v22, 0
    %v67 = vsel %vm50, %v23, 0
    %v70 = vsel %vm50, %v24, 0
    %v73 = vsel %vm50, %v25, 0
    %v76 = vsel %vm50, %v26, 0
    %v79 = vsel %vm50, %v27, 0
    %v82 = vsel %vm50, %v28, 0
    %v85 = vsel %vm50, %v29, 0
    %v88 = vsel %vm50, %v30, 0
    %v91 = vsel %vm50, %v31, 0
    %v94 = vsel %vm50, %v32, 0
    %v97 = vsel %vm50, %v33, 0
    %v100 = vsel %vm50, %v34, 0
    %v103 = vsel %vm50, %v35, 0
    %v106 = vsel %vm50, %v36, 0
    %v109 = vsel %vm50, %v37, 0
    %v112 = vsel %vm50, %v38, 0
    %v115 = vsel %vm50, %v39, 0
    %v118 = vsel %vm50, %v40, 0
    %v121 = vsel %vm50, %v41, 0
    %v124 = vsel %vm50, %v42, 0
    %v127 = vsel %vm50, %v43, 0
    %v130 = vsel %vm50, %v44, 0
    %v133 = vsel %vm50, %v45, 0
    %v136 = vsel %vm50, %v46, 0
    %v139 = vsel %vm50, %v47, 0
    %v142 = vsel %vm50, %v48, 0
    %v145 = vsel %vm50, %v49, 0
    %147 = vmatprep.subr.mxu0 0.0
    %v148 = vand.u32 %v100, 4294901760
    %149 = vmatpush1.xpose.msra.mxu0 %v148
    %150 = vmatprep.subr.mxu0 0.0
    %v151 = vand.u32 %v103, 4294901760
    %152 = vmatpush1.xpose.msra.mxu0 %v151
    %153 = vmatprep.subr.mxu0 0.0
    %v154 = vand.u32 %v106, 4294901760
    %155 = vmatpush1.xpose.msra.mxu0 %v154
    %156 = vmatprep.subr.mxu0 0.0
    %v157 = vand.u32 %v109, 4294901760
    %158 = vmatpush1.xpose.msra.mxu0 %v157
    %159 = vmatprep.subr.mxu0 0.0
    %v160 = vand.u32 %v112, 4294901760
    %161 = vmatpush1.xpose.msra.mxu0 %v160
    %162 = vmatprep.subr.mxu0 0.0
    %v163 = vand.u32 %v115, 4294901760
    %164 = vmatpush1.xpose.msra.mxu0 %v163
    %165 = vmatprep.subr.mxu0 0.0
    %v166 = vand.u32 %v118, 4294901760
    %167 = vmatpush1.xpose.msra.mxu0 %v166
    %168 = vmatprep.subr.mxu0 0.0
    %v169 = vand.u32 %v121, 4294901760
    %170 = vmatpush1.xpose.msra.mxu0 %v169
    %171 = vmatprep.subr.mxu0 0.0
    %v172 = vand.u32 %v124, 4294901760
    %173 = vmatpush1.xpose.msra.mxu0 %v172
    %174 = vmatprep.subr.mxu0 0.0
    %v175 = vand.u32 %v127, 4294901760
    %176 = vmatpush1.xpose.msra.mxu0 %v175
    %177 = vmatprep.subr.mxu0 0.0
    %v178 = vand.u32 %v130, 4294901760
    %179 = vmatpush1.xpose.msra.mxu0 %v178
    %180 = vmatprep.subr.mxu0 0.0
    %v181 = vand.u32 %v133, 4294901760
    %182 = vmatpush1.xpose.msra.mxu0 %v181
    %183 = vmatprep.subr.mxu0 0.0
    %v184 = vand.u32 %v136, 4294901760
    %185 = vmatpush1.xpose.msra.mxu0 %v184
    %186 = vmatprep.subr.mxu0 0.0
    %v187 = vand.u32 %v139, 4294901760
    %188 = vmatpush1.xpose.msra.mxu0 %v187
    %189 = vmatprep.subr.mxu0 0.0
    %v190 = vand.u32 %v142, 4294901760
    %191 = vmatpush1.xpose.msra.mxu0 %v190
    %192 = vmatprep.subr.mxu0 0.0
    %v193 = vand.u32 %v145, 4294901760
    %194 = vmatpush1.xpose.msra.mxu0 %v193
    %195 = vmatprep.subr.mxu0 0.0
    %196 = vmatpush1.xpose.msra.mxu0 0.0
    %197 = vmatprep.subr.mxu0 0.0
    %198 = vmatpush1.xpose.msra.mxu0 0.0
    %199 = vmatprep.subr.mxu0 0.0
    %200 = vmatpush1.xpose.msra.mxu0 0.0
    %201 = vmatprep.subr.mxu0 0.0
    %202 = vmatpush1.xpose.msra.mxu0 0.0
    %203 = vmatprep.subr.mxu0 0.0
    %204 = vmatpush1.xpose.msra.mxu0 0.0
    %205 = vmatprep.subr.mxu0 0.0
    %206 = vmatpush1.xpose.msra.mxu0 0.0
    %207 = vmatprep.subr.mxu0 0.0
    %208 = vmatpush1.xpose.msra.mxu0 0.0
    %209 = vmatprep.subr.mxu0 0.0
    %210 = vmatpush1.xpose.msra.mxu0 0.0
    %211 = vmatprep.subr.mxu0 0.0
    %212 = vmatpush1.xpose.msra.mxu0 0.0
    %213 = vmatprep.subr.mxu0 0.0
    %214 = vmatpush1.xpose.msra.mxu0 0.0
    %215 = vmatprep.subr.mxu0 0.0
    %216 = vmatpush1.xpose.msra.mxu0 0.0
    %217 = vmatprep.subr.mxu0 0.0
    %218 = vmatpush1.xpose.msra.mxu0 0.0
    %219 = vmatprep.subr.mxu0 0.0
    %220 = vmatpush1.xpose.msra.mxu0 0.0
    %221 = vmatprep.subr.mxu0 0.0
    %222 = vmatpush1.xpose.msra.mxu0 0.0
    %223 = vmatprep.subr.mxu0 0.0
    %224 = vmatpush1.xpose.msra.mxu0 0.0
    %225 = vmatprep.subr.mxu0 0.0
    %226 = vmatpush1.xpose.msra.mxu0 0.0
    %227 = vmatprep.mubr.f32.mxu0 0.0
    %v228 = vand.u32 %v52, 4294901760
    %v229 = vsub.f32 %v52, %v228
    %v230 = vand.u32 %v229, 4294901760
    %v231 = vsub.f32 %v229, %v230
    %v232 = vand.u32 %v231, 4294901760
    %233 = vmatmul.mubr.f32.gmra.mrb[0].mxu0 %v232
    %v234 = vpop.f32.mrb[0].mxu0
    %v235 = vadd.f32 0.0, %v234
    %v236 = vpop.f32.mrb[0].mxu0
    %237 = vmatprep.mubr.f32.mxu0 0.0
    %v238 = vand.u32 %v55, 4294901760
    %v239 = vsub.f32 %v55, %v238
    %v240 = vand.u32 %v239, 4294901760
    %v241 = vsub.f32 %v239, %v240
    %v242 = vand.u32 %v241, 4294901760
    %243 = vmatmul.mubr.f32.gmra.mrb[0].mxu0 %v242
    %v244 = vpop.f32.mrb[0].mxu0
    %v245 = vadd.f32 0.0, %v244
    %v246 = vpop.f32.mrb[0].mxu0
    %247 = vmatprep.mubr.f32.mxu0 0.0
    %v248 = vand.u32 %v58, 4294901760
    %v249 = vsub.f32 %v58, %v248
    %v250 = vand.u32 %v249, 4294901760
    %v251 = vsub.f32 %v249, %v250
    %v252 = vand.u32 %v251, 4294901760
    %253 = vmatmul.mubr.f32.gmra.mrb[0].mxu0 %v252
    %v254 = vpop.f32.mrb[0].mxu0
    %v255 = vadd.f32 0.0, %v254
    %v256 = vpop.f32.mrb[0].mxu0
    %257 = vmatprep.mubr.f32.mxu0 0.0
    %v258 = vand.u32 %v61, 4294901760
    %v259 = vsub.f32 %v61, %v258
    %v260 = vand.u32 %v259, 4294901760
    %v261 = vsub.f32 %v259, %v260
    %v262 = vand.u32 %v261, 4294901760
    %263 = vmatmul.mubr.f32.gmra.mrb[0].mxu0 %v262
    %v264 = vpop.f32.mrb[0].mxu0
    %v265 = vadd.f32 0.0, %v264
    %v266 = vpop.f32.mrb[0].mxu0
    %267 = vmatprep.mubr.f32.mxu0 0.0
    %v268 = vand.u32 %v64, 4294901760
    %v269 = vsub.f32 %v64, %v268
    %v270 = vand.u32 %v269, 4294901760
    %v271 = vsub.f32 %v269, %v270
    %v272 = vand.u32 %v271, 4294901760
    %273 = vmatmul.mubr.f32.gmra.mrb[0].mxu0 %v272
    %v274 = vpop.f32.mrb[0].mxu0
    %v275 = vadd.f32 0.0, %v274
    %v276 = vpop.f32.mrb[0].mxu0
    %277 = vmatprep.mubr.f32.mxu0 0.0
    %v278 = vand.u32 %v67, 4294901760
    %v279 = vsub.f32 %v67, %v278
    %v280 = vand.u32 %v279, 4294901760
    %v281 = vsub.f32 %v279, %v280
    %v282 = vand.u32 %v281, 4294901760
    %283 = vmatmul.mubr.f32.gmra.mrb[0].mxu0 %v282
    %v284 = vpop.f32.mrb[0].mxu0
    %v285 = vadd.f32 0.0, %v284
    %v286 = vpop.f32.mrb[0].mxu0
    %287 = vmatprep.mubr.f32.mxu0 0.0
    %v288 = vand.u32 %v70, 4294901760
    %v289 = vsub.f32 %v70, %v288
    %v290 = vand.u32 %v289, 4294901760
    %v291 = vsub.f32 %v289, %v290
    %v292 = vand.u32 %v291, 4294901760
    %293 = vmatmul.mubr.f32.gmra.mrb[0].mxu0 %v292
    %v294 = vpop.f32.mrb[0].mxu0
    %v295 = vadd.f32 0.0, %v294
    %v296 = vpop.f32.mrb[0].mxu0
    %297 = vmatprep.mubr.f32.mxu0 0.0
    %v298 = vand.u32 %v73, 4294901760
    %v299 = vsub.f32 %v73, %v298
    %v300 = vand.u32 %v299, 4294901760
    %v301 = vsub.f32 %v299, %v300
    %v302 = vand.u32 %v301, 4294901760
    %303 = vmatmul.mubr.f32.gmra.mrb[0].mxu0 %v302
    %v304 = vpop.f32.mrb[0].mxu0
    %v305 = vadd.f32 0.0, %v304
    %v306 = vpop.f32.mrb[0].mxu0
    %307 = vmatprep.mubr.f32.mxu0 0.0
    %v308 = vand.u32 %v76, 4294901760
    %v309 = vsub.f32 %v76, %v308
    %v310 = vand.u32 %v309, 4294901760
    %v311 = vsub.f32 %v309, %v310
    %v312 = vand.u32 %v311, 4294901760
    %313 = vmatmul.mubr.f32.gmra.mrb[0].mxu0 %v312
    %v314 = vpop.f32.mrb[0].mxu0
    %v315 = vadd.f32 0.0, %v314
    %v316 = vpop.f32.mrb[0].mxu0
    %317 = vmatprep.mubr.f32.mxu0 0.0
    %v318 = vand.u32 %v79, 4294901760
    %v319 = vsub.f32 %v79, %v318
    %v320 = vand.u32 %v319, 4294901760
    %v321 = vsub.f32 %v319, %v320
    %v322 = vand.u32 %v321, 4294901760
    %323 = vmatmul.mubr.f32.gmra.mrb[0].mxu0 %v322
    %v324 = vpop.f32.mrb[0].mxu0
    %v325 = vadd.f32 0.0, %v324
    %v326 = vpop.f32.mrb[0].mxu0
    %327 = vmatprep.mubr.f32.mxu0 0.0
    %v328 = vand.u32 %v82, 4294901760
    %v329 = vsub.f32 %v82, %v328
    %v330 = vand.u32 %v329, 4294901760
    %v331 = vsub.f32 %v329, %v330
    %v332 = vand.u32 %v331, 4294901760
    %333 = vmatmul.mubr.f32.gmra.mrb[0].mxu0 %v332
    %v334 = vpop.f32.mrb[0].mxu0
    %v335 = vadd.f32 0.0, %v334
    %v336 = vpop.f32.mrb[0].mxu0
    %337 = vmatprep.mubr.f32.mxu0 0.0
    %v338 = vand.u32 %v85, 4294901760
    %v339 = vsub.f32 %v85, %v338
    %v340 = vand.u32 %v339, 4294901760
    %v341 = vsub.f32 %v339, %v340
    %v342 = vand.u32 %v341, 4294901760
    %343 = vmatmul.mubr.f32.gmra.mrb[0].mxu0 %v342
    %v344 = vpop.f32.mrb[0].mxu0
    %v345 = vadd.f32 0.0, %v344
    %v346 = vpop.f32.mrb[0].mxu0
    %347 = vmatprep.mubr.f32.mxu0 0.0
    %v348 = vand.u32 %v88, 4294901760
    %v349 = vsub.f32 %v88, %v348
    %v350 = vand.u32 %v349, 4294901760
    %v351 = vsub.f32 %v349, %v350
    %v352 = vand.u32 %v351, 4294901760
    %353 = vmatmul.mubr.f32.gmra.mrb[0].mxu0 %v352
    %v354 = vpop.f32.mrb[0].mxu0
    %v355 = vadd.f32 0.0, %v354
    %v356 = vpop.f32.mrb[0].mxu0
    %357 = vmatprep.mubr.f32.mxu0 0.0
    %v358 = vand.u32 %v91, 4294901760
    %v359 = vsub.f32 %v91, %v358
    %v360 = vand.u32 %v359, 4294901760
    %v361 = vsub.f32 %v359, %v360
    %v362 = vand.u32 %v361, 4294901760
    %363 = vmatmul.mubr.f32.gmra.mrb[0].mxu0 %v362
    %v364 = vpop.f32.mrb[0].mxu0
    %v365 = vadd.f32 0.0, %v364
    %v366 = vpop.f32.mrb[0].mxu0
    %367 = vmatprep.mubr.f32.mxu0 0.0
    %v368 = vand.u32 %v94, 4294901760
    %v369 = vsub.f32 %v94, %v368
    %v370 = vand.u32 %v369, 4294901760
    %v371 = vsub.f32 %v369, %v370
    %v372 = vand.u32 %v371, 4294901760
    %373 = vmatmul.mubr.f32.gmra.mrb[0].mxu0 %v372
    %v374 = vpop.f32.mrb[0].mxu0
    %v375 = vadd.f32 0.0, %v374
    %v376 = vpop.f32.mrb[0].mxu0
    %377 = vmatprep.mubr.f32.mxu0 0.0
    %v378 = vand.u32 %v97, 4294901760
    %v379 = vsub.f32 %v97, %v378
    %v380 = vand.u32 %v379, 4294901760
    %v381 = vsub.f32 %v379, %v380
    %v382 = vand.u32 %v381, 4294901760
    %383 = vmatmul.mubr.f32.gmra.mrb[0].mxu0 %v382
    %v384 = vpop.f32.mrb[0].mxu0
    %v385 = vadd.f32 0.0, %v384
    %v386 = vpop.f32.mrb[0].mxu0
    %387 = vdwg.mxu0
    %388 = vmatprep.subr.mxu0 0.0
    %v389 = vand.u32 %v100, 4294901760
    %v390 = vsub.f32 %v100, %v389
    %v391 = vand.u32 %v390, 4294901760
    %v392 = vsub.f32 %v390, %v391
    %v393 = vand.u32 %v392, 4294901760
    %394 = vmatpush1.xpose.msra.mxu0 %v393
    %395 = vmatprep.subr.mxu0 0.0
    %v396 = vand.u32 %v103, 4294901760
    %v397 = vsub.f32 %v103, %v396
    %v398 = vand.u32 %v397, 4294901760
    %v399 = vsub.f32 %v397, %v398
    %v400 = vand.u32 %v399, 4294901760
    %401 = vmatpush1.xpose.msra.mxu0 %v400
    %402 = vmatprep.subr.mxu0 0.0
    %v403 = vand.u32 %v106, 4294901760
    %v404 = vsub.f32 %v106, %v403
    %v405 = vand.u32 %v404, 4294901760
    %v406 = vsub.f32 %v404, %v405
    %v407 = vand.u32 %v406, 4294901760
    %408 = vmatpush1.xpose.msra.mxu0 %v407
    %409 = vmatprep.subr.mxu0 0.0
    %v410 = vand.u32 %v109, 4294901760
    %v411 = vsub.f32 %v109, %v410
    %v412 = vand.u32 %v411, 4294901760
    %v413 = vsub.f32 %v411, %v412
    %v414 = vand.u32 %v413, 4294901760
    %415 = vmatpush1.xpose.msra.mxu0 %v414
    %416 = vmatprep.subr.mxu0 0.0
    %v417 = vand.u32 %v112, 4294901760
    %v418 = vsub.f32 %v112, %v417
    %v419 = vand.u32 %v418, 4294901760
    %v420 = vsub.f32 %v418, %v419
    %v421 = vand.u32 %v420, 4294901760
    %422 = vmatpush1.xpose.msra.mxu0 %v421
    %423 = vmatprep.subr.mxu0 0.0
    %v424 = vand.u32 %v115, 4294901760
    %v425 = vsub.f32 %v115, %v424
    %v426 = vand.u32 %v425, 4294901760
    %v427 = vsub.f32 %v425, %v426
    %v428 = vand.u32 %v427, 4294901760
    %429 = vmatpush1.xpose.msra.mxu0 %v428
    %430 = vmatprep.subr.mxu0 0.0
    %v431 = vand.u32 %v118, 4294901760
    %v432 = vsub.f32 %v118, %v431
    %v433 = vand.u32 %v432, 4294901760
    %v434 = vsub.f32 %v432, %v433
    %v435 = vand.u32 %v434, 4294901760
    %436 = vmatpush1.xpose.msra.mxu0 %v435
    %437 = vmatprep.subr.mxu0 0.0
    %v438 = vand.u32 %v121, 4294901760
    %v439 = vsub.f32 %v121, %v438
    %v440 = vand.u32 %v439, 4294901760
    %v441 = vsub.f32 %v439, %v440
    %v442 = vand.u32 %v441, 4294901760
    %443 = vmatpush1.xpose.msra.mxu0 %v442
    %444 = vmatprep.subr.mxu0 0.0
    %v445 = vand.u32 %v124, 4294901760
    %v446 = vsub.f32 %v124, %v445
    %v447 = vand.u32 %v446, 4294901760
    %v448 = vsub.f32 %v446, %v447
    %v449 = vand.u32 %v448, 4294901760
    %450 = vmatpush1.xpose.msra.mxu0 %v449
    %451 = vmatprep.subr.mxu0 0.0
    %v452 = vand.u32 %v127, 4294901760
    %v453 = vsub.f32 %v127, %v452
    %v454 = vand.u32 %v453, 4294901760
    %v455 = vsub.f32 %v453, %v454
    %v456 = vand.u32 %v455, 4294901760
    %457 = vmatpush1.xpose.msra.mxu0 %v456
    %458 = vmatprep.subr.mxu0 0.0
    %v459 = vand.u32 %v130, 4294901760
    %v460 = vsub.f32 %v130, %v459
    %v461 = vand.u32 %v460, 4294901760
    %v462 = vsub.f32 %v460, %v461
    %v463 = vand.u32 %v462, 4294901760
    %464 = vmatpush1.xpose.msra.mxu0 %v463
    %465 = vmatprep.subr.mxu0 0.0
    %v466 = vand.u32 %v133, 4294901760
    %v467 = vsub.f32 %v133, %v466
    %v468 = vand.u32 %v467, 4294901760
    %v469 = vsub.f32 %v467, %v468
    %v470 = vand.u32 %v469, 4294901760
    %471 = vmatpush1.xpose.msra.mxu0 %v470
    %472 = vmatprep.subr.mxu0 0.0
    %v473 = vand.u32 %v136, 4294901760
    %v474 = vsub.f32 %v136, %v473
    %v475 = vand.u32 %v474, 4294901760
    %v476 = vsub.f32 %v474, %v475
    %v477 = vand.u32 %v476, 4294901760
    %478 = vmatpush1.xpose.msra.mxu0 %v477
    %479 = vmatprep.subr.mxu0 0.0
    %v480 = vand.u32 %v139, 4294901760
    %v481 = vsub.f32 %v139, %v480
    %v482 = vand.u32 %v481, 4294901760
    %v483 = vsub.f32 %v481, %v482
    %v484 = vand.u32 %v483, 4294901760
    %485 = vmatpush1.xpose.msra.mxu0 %v484
    %486 = vmatprep.subr.mxu0 0.0
    %v487 = vand.u32 %v142, 4294901760
    %v488 = vsub.f32 %v142, %v487
    %v489 = vand.u32 %v488, 4294901760
    %v490 = vsub.f32 %v488, %v489
    %v491 = vand.u32 %v490, 4294901760
    %492 = vmatpush1.xpose.msra.mxu0 %v491
    %493 = vmatprep.subr.mxu0 0.0
    %v494 = vand.u32 %v145, 4294901760
    %v495 = vsub.f32 %v145, %v494
    %v496 = vand.u32 %v495, 4294901760
    %v497 = vsub.f32 %v495, %v496
    %v498 = vand.u32 %v497, 4294901760
    %499 = vmatpush1.xpose.msra.mxu0 %v498
    %500 = vmatprep.subr.mxu0 0.0
    %501 = vmatpush1.xpose.msra.mxu0 0.0
    %502 = vmatprep.subr.mxu0 0.0
    %503 = vmatpush1.xpose.msra.mxu0 0.0
    %504 = vmatprep.subr.mxu0 0.0
    %505 = vmatpush1.xpose.msra.mxu0 0.0
    %506 = vmatprep.subr.mxu0 0.0
    %507 = vmatpush1.xpose.msra.mxu0 0.0
    %508 = vmatprep.subr.mxu0 0.0
    %509 = vmatpush1.xpose.msra.mxu0 0.0
    %510 = vmatprep.subr.mxu0 0.0
    %511 = vmatpush1.xpose.msra.mxu0 0.0
    %512 = vmatprep.subr.mxu0 0.0
    %513 = vmatpush1.xpose.msra.mxu0 0.0
    %514 = vmatprep.subr.mxu0 0.0
    %515 = vmatpush1.xpose.msra.mxu0 0.0
    %516 = vmatprep.subr.mxu0 0.0
    %517 = vmatpush1.xpose.msra.mxu0 0.0
    %518 = vmatprep.subr.mxu0 0.0
    %519 = vmatpush1.xpose.msra.mxu0 0.0
    %520 = vmatprep.subr.mxu0 0.0
    %521 = vmatpush1.xpose.msra.mxu0 0.0
    %522 = vmatprep.subr.mxu0 0.0
    %523 = vmatpush1.xpose.msra.mxu0 0.0
    %524 = vmatprep.subr.mxu0 0.0
    %525 = vmatpush1.xpose.msra.mxu0 0.0
    %526 = vmatprep.subr.mxu0 0.0
    %527 = vmatpush1.xpose.msra.mxu0 0.0
    %528 = vmatprep.subr.mxu0 0.0
    %529 = vmatpush1.xpose.msra.mxu0 0.0
    %530 = vmatprep.subr.mxu0 0.0
    %531 = vmatpush1.xpose.msra.mxu0 0.0
    %532 = vmatprep.mubr.f32.mxu0 0.0
    %v533 = vand.u32 %v52, 4294901760
    %534 = vmatmul.mubr.f32.gmra.mrb[0].mxu0 %v533
    %v535 = vpop.f32.mrb[0].mxu0
    %v536 = vadd.f32 %v235, %v535
    %v537 = vpop.f32.mrb[0].mxu0
    %538 = vmatprep.mubr.f32.mxu0 0.0
    %v539 = vand.u32 %v55, 4294901760
    %540 = vmatmul.mubr.f32.gmra.mrb[0].mxu0 %v539
    %v541 = vpop.f32.mrb[0].mxu0
    %v542 = vadd.f32 %v245, %v541
    %v543 = vpop.f32.mrb[0].mxu0
    %544 = vmatprep.mubr.f32.mxu0 0.0
    %v545 = vand.u32 %v58, 4294901760
    %546 = vmatmul.mubr.f32.gmra.mrb[0].mxu0 %v545
    %v547 = vpop.f32.mrb[0].mxu0
    %v548 = vadd.f32 %v255, %v547
    %v549 = vpop.f32.mrb[0].mxu0
    %550 = vmatprep.mubr.f32.mxu0 0.0
    %v551 = vand.u32 %v61, 4294901760
    %552 = vmatmul.mubr.f32.gmra.mrb[0].mxu0 %v551
    %v553 = vpop.f32.mrb[0].mxu0
    %v554 = vadd.f32 %v265, %v553
    %v555 = vpop.f32.mrb[0].mxu0
    %556 = vmatprep.mubr.f32.mxu0 0.0
    %v557 = vand.u32 %v64, 4294901760
    %558 = vmatmul.mubr.f32.gmra.mrb[0].mxu0 %v557
    %v559 = vpop.f32.mrb[0].mxu0
    %v560 = vadd.f32 %v275, %v559
    %v561 = vpop.f32.mrb[0].mxu0
    %562 = vmatprep.mubr.f32.mxu0 0.0
    %v563 = vand.u32 %v67, 4294901760
    %564 = vmatmul.mubr.f32.gmra.mrb[0].mxu0 %v563
    %v565 = vpop.f32.mrb[0].mxu0
    %v566 = vadd.f32 %v285, %v565
    %v567 = vpop.f32.mrb[0].mxu0
    %568 = vmatprep.mubr.f32.mxu0 0.0
    %v569 = vand.u32 %v70, 4294901760
    %570 = vmatmul.mubr.f32.gmra.mrb[0].mxu0 %v569
    %v571 = vpop.f32.mrb[0].mxu0
    %v572 = vadd.f32 %v295, %v571
    %v573 = vpop.f32.mrb[0].mxu0
    %574 = vmatprep.mubr.f32.mxu0 0.0
    %v575 = vand.u32 %v73, 4294901760
    %576 = vmatmul.mubr.f32.gmra.mrb[0].mxu0 %v575
    %v577 = vpop.f32.mrb[0].mxu0
    %v578 = vadd.f32 %v305, %v577
    %v579 = vpop.f32.mrb[0].mxu0
    %580 = vmatprep.mubr.f32.mxu0 0.0
    %v581 = vand.u32 %v76, 4294901760
    %582 = vmatmul.mubr.f32.gmra.mrb[0].mxu0 %v581
    %v583 = vpop.f32.mrb[0].mxu0
    %v584 = vadd.f32 %v315, %v583
    %v585 = vpop.f32.mrb[0].mxu0
    %586 = vmatprep.mubr.f32.mxu0 0.0
    %v587 = vand.u32 %v79, 4294901760
    %588 = vmatmul.mubr.f32.gmra.mrb[0].mxu0 %v587
    %v589 = vpop.f32.mrb[0].mxu0
    %v590 = vadd.f32 %v325, %v589
    %v591 = vpop.f32.mrb[0].mxu0
    %592 = vmatprep.mubr.f32.mxu0 0.0
    %v593 = vand.u32 %v82, 4294901760
    %594 = vmatmul.mubr.f32.gmra.mrb[0].mxu0 %v593
    %v595 = vpop.f32.mrb[0].mxu0
    %v596 = vadd.f32 %v335, %v595
    %v597 = vpop.f32.mrb[0].mxu0
    %598 = vmatprep.mubr.f32.mxu0 0.0
    %v599 = vand.u32 %v85, 4294901760
    %600 = vmatmul.mubr.f32.gmra.mrb[0].mxu0 %v599
    %v601 = vpop.f32.mrb[0].mxu0
    %v602 = vadd.f32 %v345, %v601
    %v603 = vpop.f32.mrb[0].mxu0
    %604 = vmatprep.mubr.f32.mxu0 0.0
    %v605 = vand.u32 %v88, 4294901760
    %606 = vmatmul.mubr.f32.gmra.mrb[0].mxu0 %v605
    %v607 = vpop.f32.mrb[0].mxu0
    %v608 = vadd.f32 %v355, %v607
    %v609 = vpop.f32.mrb[0].mxu0
    %610 = vmatprep.mubr.f32.mxu0 0.0
    %v611 = vand.u32 %v91, 4294901760
    %612 = vmatmul.mubr.f32.gmra.mrb[0].mxu0 %v611
    %v613 = vpop.f32.mrb[0].mxu0
    %v614 = vadd.f32 %v365, %v613
    %v615 = vpop.f32.mrb[0].mxu0
    %616 = vmatprep.mubr.f32.mxu0 0.0
    %v617 = vand.u32 %v94, 4294901760
    %618 = vmatmul.mubr.f32.gmra.mrb[0].mxu0 %v617
    %v619 = vpop.f32.mrb[0].mxu0
    %v620 = vadd.f32 %v375, %v619
    %v621 = vpop.f32.mrb[0].mxu0
    %622 = vmatprep.mubr.f32.mxu0 0.0
    %v623 = vand.u32 %v97, 4294901760
    %624 = vmatmul.mubr.f32.gmra.mrb[0].mxu0 %v623
    %v625 = vpop.f32.mrb[0].mxu0
    %v626 = vadd.f32 %v385, %v625
    %v627 = vpop.f32.mrb[0].mxu0
    %628 = vdwg.mxu0
    %629 = vmatprep.subr.mxu0 0.0
    %v630 = vand.u32 %v100, 4294901760
    %v631 = vsub.f32 %v100, %v630
    %632 = vmatpush1.xpose.msra.mxu0 %v631
    %633 = vmatprep.subr.mxu0 0.0
    %v634 = vand.u32 %v103, 4294901760
    %v635 = vsub.f32 %v103, %v634
    %636 = vmatpush1.xpose.msra.mxu0 %v635
    %637 = vmatprep.subr.mxu0 0.0
    %v638 = vand.u32 %v106, 4294901760
    %v639 = vsub.f32 %v106, %v638
    %640 = vmatpush1.xpose.msra.mxu0 %v639
    %641 = vmatprep.subr.mxu0 0.0
    %v642 = vand.u32 %v109, 4294901760
    %v643 = vsub.f32 %v109, %v642
    %644 = vmatpush1.xpose.msra.mxu0 %v643
    %645 = vmatprep.subr.mxu0 0.0
    %v646 = vand.u32 %v112, 4294901760
    %v647 = vsub.f32 %v112, %v646
    %648 = vmatpush1.xpose.msra.mxu0 %v647
    %649 = vmatprep.subr.mxu0 0.0
    %v650 = vand.u32 %v115, 4294901760
    %v651 = vsub.f32 %v115, %v650
    %652 = vmatpush1.xpose.msra.mxu0 %v651
    %653 = vmatprep.subr.mxu0 0.0
    %v654 = vand.u32 %v118, 4294901760
    %v655 = vsub.f32 %v118, %v654
    %656 = vmatpush1.xpose.msra.mxu0 %v655
    %657 = vmatprep.subr.mxu0 0.0
    %v658 = vand.u32 %v121, 4294901760
    %v659 = vsub.f32 %v121, %v658
    %660 = vmatpush1.xpose.msra.mxu0 %v659
    %661 = vmatprep.subr.mxu0 0.0
    %v662 = vand.u32 %v124, 4294901760
    %v663 = vsub.f32 %v124, %v662
    %664 = vmatpush1.xpose.msra.mxu0 %v663
    %665 = vmatprep.subr.mxu0 0.0
    %v666 = vand.u32 %v127, 4294901760
    %v667 = vsub.f32 %v127, %v666
    %668 = vmatpush1.xpose.msra.mxu0 %v667
    %669 = vmatprep.subr.mxu0 0.0
    %v670 = vand.u32 %v130, 4294901760
    %v671 = vsub.f32 %v130, %v670
    %672 = vmatpush1.xpose.msra.mxu0 %v671
    %673 = vmatprep.subr.mxu0 0.0
    %v674 = vand.u32 %v133, 4294901760
    %v675 = vsub.f32 %v133, %v674
    %676 = vmatpush1.xpose.msra.mxu0 %v675
    %677 = vmatprep.subr.mxu0 0.0
    %v678 = vand.u32 %v136, 4294901760
    %v679 = vsub.f32 %v136, %v678
    %680 = vmatpush1.xpose.msra.mxu0 %v679
    %681 = vmatprep.subr.mxu0 0.0
    %v682 = vand.u32 %v139, 4294901760
    %v683 = vsub.f32 %v139, %v682
    %684 = vmatpush1.xpose.msra.mxu0 %v683
    %685 = vmatprep.subr.mxu0 0.0
    %v686 = vand.u32 %v142, 4294901760
    %v687 = vsub.f32 %v142, %v686
    %688 = vmatpush1.xpose.msra.mxu0 %v687
    %689 = vmatprep.subr.mxu0 0.0
    %v690 = vand.u32 %v145, 4294901760
    %v691 = vsub.f32 %v145, %v690
    %692 = vmatpush1.xpose.msra.mxu0 %v691
    %693 = vmatprep.subr.mxu0 0.0
    %694 = vmatpush1.xpose.msra.mxu0 0.0
    %695 = vmatprep.subr.mxu0 0.0
    %696 = vmatpush1.xpose.msra.mxu0 0.0
    %697 = vmatprep.subr.mxu0 0.0
    %698 = vmatpush1.xpose.msra.mxu0 0.0
    %699 = vmatprep.subr.mxu0 0.0
    %700 = vmatpush1.xpose.msra.mxu0 0.0
    %701 = vmatprep.subr.mxu0 0.0
    %702 = vmatpush1.xpose.msra.mxu0 0.0
    %703 = vmatprep.subr.mxu0 0.0
    %704 = vmatpush1.xpose.msra.mxu0 0.0
    %705 = vmatprep.subr.mxu0 0.0
    %706 = vmatpush1.xpose.msra.mxu0 0.0
    %707 = vmatprep.subr.mxu0 0.0
    %708 = vmatpush1.xpose.msra.mxu0 0.0
    %709 = vmatprep.subr.mxu0 0.0
    %710 = vmatpush1.xpose.msra.mxu0 0.0
    %711 = vmatprep.subr.mxu0 0.0
    %712 = vmatpush1.xpose.msra.mxu0 0.0
    %713 = vmatprep.subr.mxu0 0.0
    %714 = vmatpush1.xpose.msra.mxu0 0.0
    %715 = vmatprep.subr.mxu0 0.0
    %716 = vmatpush1.xpose.msra.mxu0 0.0
    %717 = vmatprep.subr.mxu0 0.0
    %718 = vmatpush1.xpose.msra.mxu0 0.0
    %719 = vmatprep.subr.mxu0 0.0
    %720 = vmatpush1.xpose.msra.mxu0 0.0
    %721 = vmatprep.subr.mxu0 0.0
    %722 = vmatpush1.xpose.msra.mxu0 0.0
    %723 = vmatprep.subr.mxu0 0.0
    %724 = vmatpush1.xpose.msra.mxu0 0.0
    %725 = vmatprep.mubr.f32.mxu0 0.0
    %v726 = vand.u32 %v52, 4294901760
    %v727 = vsub.f32 %v52, %v726
    %728 = vmatmul.mubr.f32.gmra.mrb[0].mxu0 %v727
    %v729 = vpop.f32.mrb[0].mxu0
    %v730 = vadd.f32 %v536, %v729
    %v731 = vpop.f32.mrb[0].mxu0
    %732 = vmatprep.mubr.f32.mxu0 0.0
    %v733 = vand.u32 %v55, 4294901760
    %v734 = vsub.f32 %v55, %v733
    %735 = vmatmul.mubr.f32.gmra.mrb[0].mxu0 %v734
    %v736 = vpop.f32.mrb[0].mxu0
    %v737 = vadd.f32 %v542, %v736
    %v738 = vpop.f32.mrb[0].mxu0
    %739 = vmatprep.mubr.f32.mxu0 0.0
    %v740 = vand.u32 %v58, 4294901760
    %v741 = vsub.f32 %v58, %v740
    %742 = vmatmul.mubr.f32.gmra.mrb[0].mxu0 %v741
    %v743 = vpop.f32.mrb[0].mxu0
    %v744 = vadd.f32 %v548, %v743
    %v745 = vpop.f32.mrb[0].mxu0
    %746 = vmatprep.mubr.f32.mxu0 0.0
    %v747 = vand.u32 %v61, 4294901760
    %v748 = vsub.f32 %v61, %v747
    %749 = vmatmul.mubr.f32.gmra.mrb[0].mxu0 %v748
    %v750 = vpop.f32.mrb[0].mxu0
    %v751 = vadd.f32 %v554, %v750
    %v752 = vpop.f32.mrb[0].mxu0
    %753 = vmatprep.mubr.f32.mxu0 0.0
    %v754 = vand.u32 %v64, 4294901760
    %v755 = vsub.f32 %v64, %v754
    %756 = vmatmul.mubr.f32.gmra.mrb[0].mxu0 %v755
    %v757 = vpop.f32.mrb[0].mxu0
    %v758 = vadd.f32 %v560, %v757
    %v759 = vpop.f32.mrb[0].mxu0
    %760 = vmatprep.mubr.f32.mxu0 0.0
    %v761 = vand.u32 %v67, 4294901760
    %v762 = vsub.f32 %v67, %v761
    %763 = vmatmul.mubr.f32.gmra.mrb[0].mxu0 %v762
    %v764 = vpop.f32.mrb[0].mxu0
    %v765 = vadd.f32 %v566, %v764
    %v766 = vpop.f32.mrb[0].mxu0
    %767 = vmatprep.mubr.f32.mxu0 0.0
    %v768 = vand.u32 %v70, 4294901760
    %v769 = vsub.f32 %v70, %v768
    %770 = vmatmul.mubr.f32.gmra.mrb[0].mxu0 %v769
    %v771 = vpop.f32.mrb[0].mxu0
    %v772 = vadd.f32 %v572, %v771
    %v773 = vpop.f32.mrb[0].mxu0
    %774 = vmatprep.mubr.f32.mxu0 0.0
    %v775 = vand.u32 %v73, 4294901760
    %v776 = vsub.f32 %v73, %v775
    %777 = vmatmul.mubr.f32.gmra.mrb[0].mxu0 %v776
    %v778 = vpop.f32.mrb[0].mxu0
    %v779 = vadd.f32 %v578, %v778
    %v780 = vpop.f32.mrb[0].mxu0
    %781 = vmatprep.mubr.f32.mxu0 0.0
    %v782 = vand.u32 %v76, 4294901760
    %v783 = vsub.f32 %v76, %v782
    %784 = vmatmul.mubr.f32.gmra.mrb[0].mxu0 %v783
    %v785 = vpop.f32.mrb[0].mxu0
    %v786 = vadd.f32 %v584, %v785
    %v787 = vpop.f32.mrb[0].mxu0
    %788 = vmatprep.mubr.f32.mxu0 0.0
    %v789 = vand.u32 %v79, 4294901760
    %v790 = vsub.f32 %v79, %v789
    %791 = vmatmul.mubr.f32.gmra.mrb[0].mxu0 %v790
    %v792 = vpop.f32.mrb[0].mxu0
    %v793 = vadd.f32 %v590, %v792
    %v794 = vpop.f32.mrb[0].mxu0
    %795 = vmatprep.mubr.f32.mxu0 0.0
    %v796 = vand.u32 %v82, 4294901760
    %v797 = vsub.f32 %v82, %v796
    %798 = vmatmul.mubr.f32.gmra.mrb[0].mxu0 %v797
    %v799 = vpop.f32.mrb[0].mxu0
    %v800 = vadd.f32 %v596, %v799
    %v801 = vpop.f32.mrb[0].mxu0
    %802 = vmatprep.mubr.f32.mxu0 0.0
    %v803 = vand.u32 %v85, 4294901760
    %v804 = vsub.f32 %v85, %v803
    %805 = vmatmul.mubr.f32.gmra.mrb[0].mxu0 %v804
    %v806 = vpop.f32.mrb[0].mxu0
    %v807 = vadd.f32 %v602, %v806
    %v808 = vpop.f32.mrb[0].mxu0
    %809 = vmatprep.mubr.f32.mxu0 0.0
    %v810 = vand.u32 %v88, 4294901760
    %v811 = vsub.f32 %v88, %v810
    %812 = vmatmul.mubr.f32.gmra.mrb[0].mxu0 %v811
    %v813 = vpop.f32.mrb[0].mxu0
    %v814 = vadd.f32 %v608, %v813
    %v815 = vpop.f32.mrb[0].mxu0
    %816 = vmatprep.mubr.f32.mxu0 0.0
    %v817 = vand.u32 %v91, 4294901760
    %v818 = vsub.f32 %v91, %v817
    %819 = vmatmul.mubr.f32.gmra.mrb[0].mxu0 %v818
    %v820 = vpop.f32.mrb[0].mxu0
    %v821 = vadd.f32 %v614, %v820
    %v822 = vpop.f32.mrb[0].mxu0
    %823 = vmatprep.mubr.f32.mxu0 0.0
    %v824 = vand.u32 %v94, 4294901760
    %v825 = vsub.f32 %v94, %v824
    %826 = vmatmul.mubr.f32.gmra.mrb[0].mxu0 %v825
    %v827 = vpop.f32.mrb[0].mxu0
    %v828 = vadd.f32 %v620, %v827
    %v829 = vpop.f32.mrb[0].mxu0
    %830 = vmatprep.mubr.f32.mxu0 0.0
    %v831 = vand.u32 %v97, 4294901760
    %v832 = vsub.f32 %v97, %v831
    %833 = vmatmul.mubr.f32.gmra.mrb[0].mxu0 %v832
    %v834 = vpop.f32.mrb[0].mxu0
    %v835 = vadd.f32 %v626, %v834
    %v836 = vpop.f32.mrb[0].mxu0
    %837 = vdwg.mxu0
    %838 = vmatprep.subr.mxu0 0.0
    %v839 = vand.u32 %v100, 4294901760
    %840 = vmatpush1.xpose.msra.mxu0 %v839
    %841 = vmatprep.subr.mxu0 0.0
    %v842 = vand.u32 %v103, 4294901760
    %843 = vmatpush1.xpose.msra.mxu0 %v842
    %844 = vmatprep.subr.mxu0 0.0
    %v845 = vand.u32 %v106, 4294901760
    %846 = vmatpush1.xpose.msra.mxu0 %v845
    %847 = vmatprep.subr.mxu0 0.0
    %v848 = vand.u32 %v109, 4294901760
    %849 = vmatpush1.xpose.msra.mxu0 %v848
    %850 = vmatprep.subr.mxu0 0.0
    %v851 = vand.u32 %v112, 4294901760
    %852 = vmatpush1.xpose.msra.mxu0 %v851
    %853 = vmatprep.subr.mxu0 0.0
    %v854 = vand.u32 %v115, 4294901760
    %855 = vmatpush1.xpose.msra.mxu0 %v854
    %856 = vmatprep.subr.mxu0 0.0
    %v857 = vand.u32 %v118, 4294901760
    %858 = vmatpush1.xpose.msra.mxu0 %v857
    %859 = vmatprep.subr.mxu0 0.0
    %v860 = vand.u32 %v121, 4294901760
    %861 = vmatpush1.xpose.msra.mxu0 %v860
    %862 = vmatprep.subr.mxu0 0.0
    %v863 = vand.u32 %v124, 4294901760
    %864 = vmatpush1.xpose.msra.mxu0 %v863
    %865 = vmatprep.subr.mxu0 0.0
    %v866 = vand.u32 %v127, 4294901760
    %867 = vmatpush1.xpose.msra.mxu0 %v866
    %868 = vmatprep.subr.mxu0 0.0
    %v869 = vand.u32 %v130, 4294901760
    %870 = vmatpush1.xpose.msra.mxu0 %v869
    %871 = vmatprep.subr.mxu0 0.0
    %v872 = vand.u32 %v133, 4294901760
    %873 = vmatpush1.xpose.msra.mxu0 %v872
    %874 = vmatprep.subr.mxu0 0.0
    %v875 = vand.u32 %v136, 4294901760
    %876 = vmatpush1.xpose.msra.mxu0 %v875
    %877 = vmatprep.subr.mxu0 0.0
    %v878 = vand.u32 %v139, 4294901760
    %879 = vmatpush1.xpose.msra.mxu0 %v878
    %880 = vmatprep.subr.mxu0 0.0
    %v881 = vand.u32 %v142, 4294901760
    %882 = vmatpush1.xpose.msra.mxu0 %v881
    %883 = vmatprep.subr.mxu0 0.0
    %v884 = vand.u32 %v145, 4294901760
    %885 = vmatpush1.xpose.msra.mxu0 %v884
    %886 = vmatprep.subr.mxu0 0.0
    %887 = vmatpush1.xpose.msra.mxu0 0.0
    %888 = vmatprep.subr.mxu0 0.0
    %889 = vmatpush1.xpose.msra.mxu0 0.0
    %890 = vmatprep.subr.mxu0 0.0
    %891 = vmatpush1.xpose.msra.mxu0 0.0
    %892 = vmatprep.subr.mxu0 0.0
    %893 = vmatpush1.xpose.msra.mxu0 0.0
    %894 = vmatprep.subr.mxu0 0.0
    %895 = vmatpush1.xpose.msra.mxu0 0.0
    %896 = vmatprep.subr.mxu0 0.0
    %897 = vmatpush1.xpose.msra.mxu0 0.0
    %898 = vmatprep.subr.mxu0 0.0
    %899 = vmatpush1.xpose.msra.mxu0 0.0
    %900 = vmatprep.subr.mxu0 0.0
    %901 = vmatpush1.xpose.msra.mxu0 0.0
    %902 = vmatprep.subr.mxu0 0.0
    %903 = vmatpush1.xpose.msra.mxu0 0.0
    %904 = vmatprep.subr.mxu0 0.0
    %905 = vmatpush1.xpose.msra.mxu0 0.0
    %906 = vmatprep.subr.mxu0 0.0
    %907 = vmatpush1.xpose.msra.mxu0 0.0
    %908 = vmatprep.subr.mxu0 0.0
    %909 = vmatpush1.xpose.msra.mxu0 0.0
    %910 = vmatprep.subr.mxu0 0.0
    %911 = vmatpush1.xpose.msra.mxu0 0.0
    %912 = vmatprep.subr.mxu0 0.0
    %913 = vmatpush1.xpose.msra.mxu0 0.0
    %914 = vmatprep.subr.mxu0 0.0
    %915 = vmatpush1.xpose.msra.mxu0 0.0
    %916 = vmatprep.subr.mxu0 0.0
    %917 = vmatpush1.xpose.msra.mxu0 0.0
    %918 = vmatprep.mubr.f32.mxu0 0.0
    %v919 = vand.u32 %v52, 4294901760
    %v920 = vsub.f32 %v52, %v919
    %v921 = vand.u32 %v920, 4294901760
    %922 = vmatmul.mubr.f32.gmra.mrb[0].mxu0 %v921
    %v923 = vpop.f32.mrb[0].mxu0
    %v924 = vadd.f32 %v730, %v923
    %v925 = vpop.f32.mrb[0].mxu0
    %926 = vmatprep.mubr.f32.mxu0 0.0
    %v927 = vand.u32 %v55, 4294901760
    %v928 = vsub.f32 %v55, %v927
    %v929 = vand.u32 %v928, 4294901760
    %930 = vmatmul.mubr.f32.gmra.mrb[0].mxu0 %v929
    %v931 = vpop.f32.mrb[0].mxu0
    %v932 = vadd.f32 %v737, %v931
    %v933 = vpop.f32.mrb[0].mxu0
    %934 = vmatprep.mubr.f32.mxu0 0.0
    %v935 = vand.u32 %v58, 4294901760
    %v936 = vsub.f32 %v58, %v935
    %v937 = vand.u32 %v936, 4294901760
    %938 = vmatmul.mubr.f32.gmra.mrb[0].mxu0 %v937
    %v939 = vpop.f32.mrb[0].mxu0
    %v940 = vadd.f32 %v744, %v939
    %v941 = vpop.f32.mrb[0].mxu0
    %942 = vmatprep.mubr.f32.mxu0 0.0
    %v943 = vand.u32 %v61, 4294901760
    %v944 = vsub.f32 %v61, %v943
    %v945 = vand.u32 %v944, 4294901760
    %946 = vmatmul.mubr.f32.gmra.mrb[0].mxu0 %v945
    %v947 = vpop.f32.mrb[0].mxu0
    %v948 = vadd.f32 %v751, %v947
    %v949 = vpop.f32.mrb[0].mxu0
    %950 = vmatprep.mubr.f32.mxu0 0.0
    %v951 = vand.u32 %v64, 4294901760
    %v952 = vsub.f32 %v64, %v951
    %v953 = vand.u32 %v952, 4294901760
    %954 = vmatmul.mubr.f32.gmra.mrb[0].mxu0 %v953
    %v955 = vpop.f32.mrb[0].mxu0
    %v956 = vadd.f32 %v758, %v955
    %v957 = vpop.f32.mrb[0].mxu0
    %958 = vmatprep.mubr.f32.mxu0 0.0
    %v959 = vand.u32 %v67, 4294901760
    %v960 = vsub.f32 %v67, %v959
    %v961 = vand.u32 %v960, 4294901760
    %962 = vmatmul.mubr.f32.gmra.mrb[0].mxu0 %v961
    %v963 = vpop.f32.mrb[0].mxu0
    %v964 = vadd.f32 %v765, %v963
    %v965 = vpop.f32.mrb[0].mxu0
    %966 = vmatprep.mubr.f32.mxu0 0.0
    %v967 = vand.u32 %v70, 4294901760
    %v968 = vsub.f32 %v70, %v967
    %v969 = vand.u32 %v968, 4294901760
    %970 = vmatmul.mubr.f32.gmra.mrb[0].mxu0 %v969
    %v971 = vpop.f32.mrb[0].mxu0
    %v972 = vadd.f32 %v772, %v971
    %v973 = vpop.f32.mrb[0].mxu0
    %974 = vmatprep.mubr.f32.mxu0 0.0
    %v975 = vand.u32 %v73, 4294901760
    %v976 = vsub.f32 %v73, %v975
    %v977 = vand.u32 %v976, 4294901760
    %978 = vmatmul.mubr.f32.gmra.mrb[0].mxu0 %v977
    %v979 = vpop.f32.mrb[0].mxu0
    %v980 = vadd.f32 %v779, %v979
    %v981 = vpop.f32.mrb[0].mxu0
    %982 = vmatprep.mubr.f32.mxu0 0.0
    %v983 = vand.u32 %v76, 4294901760
    %v984 = vsub.f32 %v76, %v983
    %v985 = vand.u32 %v984, 4294901760
    %986 = vmatmul.mubr.f32.gmra.mrb[0].mxu0 %v985
    %v987 = vpop.f32.mrb[0].mxu0
    %v988 = vadd.f32 %v786, %v987
    %v989 = vpop.f32.mrb[0].mxu0
    %990 = vmatprep.mubr.f32.mxu0 0.0
    %v991 = vand.u32 %v79, 4294901760
    %v992 = vsub.f32 %v79, %v991
    %v993 = vand.u32 %v992, 4294901760
    %994 = vmatmul.mubr.f32.gmra.mrb[0].mxu0 %v993
    %v995 = vpop.f32.mrb[0].mxu0
    %v996 = vadd.f32 %v793, %v995
    %v997 = vpop.f32.mrb[0].mxu0
    %998 = vmatprep.mubr.f32.mxu0 0.0
    %v999 = vand.u32 %v82, 4294901760
    %v1000 = vsub.f32 %v82, %v999
    %v1001 = vand.u32 %v1000, 4294901760
    %1002 = vmatmul.mubr.f32.gmra.mrb[0].mxu0 %v1001
    %v1003 = vpop.f32.mrb[0].mxu0
    %v1004 = vadd.f32 %v800, %v1003
    %v1005 = vpop.f32.mrb[0].mxu0
    %1006 = vmatprep.mubr.f32.mxu0 0.0
    %v1007 = vand.u32 %v85, 4294901760
    %v1008 = vsub.f32 %v85, %v1007
    %v1009 = vand.u32 %v1008, 4294901760
    %1010 = vmatmul.mubr.f32.gmra.mrb[0].mxu0 %v1009
    %v1011 = vpop.f32.mrb[0].mxu0
    %v1012 = vadd.f32 %v807, %v1011
    %v1013 = vpop.f32.mrb[0].mxu0
    %1014 = vmatprep.mubr.f32.mxu0 0.0
    %v1015 = vand.u32 %v88, 4294901760
    %v1016 = vsub.f32 %v88, %v1015
    %v1017 = vand.u32 %v1016, 4294901760
    %1018 = vmatmul.mubr.f32.gmra.mrb[0].mxu0 %v1017
    %v1019 = vpop.f32.mrb[0].mxu0
    %v1020 = vadd.f32 %v814, %v1019
    %v1021 = vpop.f32.mrb[0].mxu0
    %1022 = vmatprep.mubr.f32.mxu0 0.0
    %v1023 = vand.u32 %v91, 4294901760
    %v1024 = vsub.f32 %v91, %v1023
    %v1025 = vand.u32 %v1024, 4294901760
    %1026 = vmatmul.mubr.f32.gmra.mrb[0].mxu0 %v1025
    %v1027 = vpop.f32.mrb[0].mxu0
    %v1028 = vadd.f32 %v821, %v1027
    %v1029 = vpop.f32.mrb[0].mxu0
    %1030 = vmatprep.mubr.f32.mxu0 0.0
    %v1031 = vand.u32 %v94, 4294901760
    %v1032 = vsub.f32 %v94, %v1031
    %v1033 = vand.u32 %v1032, 4294901760
    %1034 = vmatmul.mubr.f32.gmra.mrb[0].mxu0 %v1033
    %v1035 = vpop.f32.mrb[0].mxu0
    %v1036 = vadd.f32 %v828, %v1035
    %v1037 = vpop.f32.mrb[0].mxu0
    %1038 = vmatprep.mubr.f32.mxu0 0.0
    %v1039 = vand.u32 %v97, 4294901760
    %v1040 = vsub.f32 %v97, %v1039
    %v1041 = vand.u32 %v1040, 4294901760
    %1042 = vmatmul.mubr.f32.gmra.mrb[0].mxu0 %v1041
    %v1043 = vpop.f32.mrb[0].mxu0
    %v1044 = vadd.f32 %v835, %v1043
    %v1045 = vpop.f32.mrb[0].mxu0
    %1046 = vdwg.mxu0
    %1047 = vmatprep.subr.mxu0 0.0
    %v1048 = vand.u32 %v100, 4294901760
    %v1049 = vsub.f32 %v100, %v1048
    %v1050 = vand.u32 %v1049, 4294901760
    %1051 = vmatpush1.xpose.msra.mxu0 %v1050
    %1052 = vmatprep.subr.mxu0 0.0
    %v1053 = vand.u32 %v103, 4294901760
    %v1054 = vsub.f32 %v103, %v1053
    %v1055 = vand.u32 %v1054, 4294901760
    %1056 = vmatpush1.xpose.msra.mxu0 %v1055
    %1057 = vmatprep.subr.mxu0 0.0
    %v1058 = vand.u32 %v106, 4294901760
    %v1059 = vsub.f32 %v106, %v1058
    %v1060 = vand.u32 %v1059, 4294901760
    %1061 = vmatpush1.xpose.msra.mxu0 %v1060
    %1062 = vmatprep.subr.mxu0 0.0
    %v1063 = vand.u32 %v109, 4294901760
    %v1064 = vsub.f32 %v109, %v1063
    %v1065 = vand.u32 %v1064, 4294901760
    %1066 = vmatpush1.xpose.msra.mxu0 %v1065
    %1067 = vmatprep.subr.mxu0 0.0
    %v1068 = vand.u32 %v112, 4294901760
    %v1069 = vsub.f32 %v112, %v1068
    %v1070 = vand.u32 %v1069, 4294901760
    %1071 = vmatpush1.xpose.msra.mxu0 %v1070
    %1072 = vmatprep.subr.mxu0 0.0
    %v1073 = vand.u32 %v115, 4294901760
    %v1074 = vsub.f32 %v115, %v1073
    %v1075 = vand.u32 %v1074, 4294901760
    %1076 = vmatpush1.xpose.msra.mxu0 %v1075
    %1077 = vmatprep.subr.mxu0 0.0
    %v1078 = vand.u32 %v118, 4294901760
    %v1079 = vsub.f32 %v118, %v1078
    %v1080 = vand.u32 %v1079, 4294901760
    %1081 = vmatpush1.xpose.msra.mxu0 %v1080
    %1082 = vmatprep.subr.mxu0 0.0
    %v1083 = vand.u32 %v121, 4294901760
    %v1084 = vsub.f32 %v121, %v1083
    %v1085 = vand.u32 %v1084, 4294901760
    %1086 = vmatpush1.xpose.msra.mxu0 %v1085
    %1087 = vmatprep.subr.mxu0 0.0
    %v1088 = vand.u32 %v124, 4294901760
    %v1089 = vsub.f32 %v124, %v1088
    %v1090 = vand.u32 %v1089, 4294901760
    %1091 = vmatpush1.xpose.msra.mxu0 %v1090
    %1092 = vmatprep.subr.mxu0 0.0
    %v1093 = vand.u32 %v127, 4294901760
    %v1094 = vsub.f32 %v127, %v1093
    %v1095 = vand.u32 %v1094, 4294901760
    %1096 = vmatpush1.xpose.msra.mxu0 %v1095
    %1097 = vmatprep.subr.mxu0 0.0
    %v1098 = vand.u32 %v130, 4294901760
    %v1099 = vsub.f32 %v130, %v1098
    %v1100 = vand.u32 %v1099, 4294901760
    %1101 = vmatpush1.xpose.msra.mxu0 %v1100
    %1102 = vmatprep.subr.mxu0 0.0
    %v1103 = vand.u32 %v133, 4294901760
    %v1104 = vsub.f32 %v133, %v1103
    %v1105 = vand.u32 %v1104, 4294901760
    %1106 = vmatpush1.xpose.msra.mxu0 %v1105
    %1107 = vmatprep.subr.mxu0 0.0
    %v1108 = vand.u32 %v136, 4294901760
    %v1109 = vsub.f32 %v136, %v1108
    %v1110 = vand.u32 %v1109, 4294901760
    %1111 = vmatpush1.xpose.msra.mxu0 %v1110
    %1112 = vmatprep.subr.mxu0 0.0
    %v1113 = vand.u32 %v139, 4294901760
    %v1114 = vsub.f32 %v139, %v1113
    %v1115 = vand.u32 %v1114, 4294901760
    %1116 = vmatpush1.xpose.msra.mxu0 %v1115
    %1117 = vmatprep.subr.mxu0 0.0
    %v1118 = vand.u32 %v142, 4294901760
    %v1119 = vsub.f32 %v142, %v1118
    %v1120 = vand.u32 %v1119, 4294901760
    %1121 = vmatpush1.xpose.msra.mxu0 %v1120
    %1122 = vmatprep.subr.mxu0 0.0
    %v1123 = vand.u32 %v145, 4294901760
    %v1124 = vsub.f32 %v145, %v1123
    %v1125 = vand.u32 %v1124, 4294901760
    %1126 = vmatpush1.xpose.msra.mxu0 %v1125
    %1127 = vmatprep.subr.mxu0 0.0
    %1128 = vmatpush1.xpose.msra.mxu0 0.0
    %1129 = vmatprep.subr.mxu0 0.0
    %1130 = vmatpush1.xpose.msra.mxu0 0.0
    %1131 = vmatprep.subr.mxu0 0.0
    %1132 = vmatpush1.xpose.msra.mxu0 0.0
    %1133 = vmatprep.subr.mxu0 0.0
    %1134 = vmatpush1.xpose.msra.mxu0 0.0
    %1135 = vmatprep.subr.mxu0 0.0
    %1136 = vmatpush1.xpose.msra.mxu0 0.0
    %1137 = vmatprep.subr.mxu0 0.0
    %1138 = vmatpush1.xpose.msra.mxu0 0.0
    %1139 = vmatprep.subr.mxu0 0.0
    %1140 = vmatpush1.xpose.msra.mxu0 0.0
    %1141 = vmatprep.subr.mxu0 0.0
    %1142 = vmatpush1.xpose.msra.mxu0 0.0
    %1143 = vmatprep.subr.mxu0 0.0
    %1144 = vmatpush1.xpose.msra.mxu0 0.0
    %1145 = vmatprep.subr.mxu0 0.0
    %1146 = vmatpush1.xpose.msra.mxu0 0.0
    %1147 = vmatprep.subr.mxu0 0.0
    %1148 = vmatpush1.xpose.msra.mxu0 0.0
    %1149 = vmatprep.subr.mxu0 0.0
    %1150 = vmatpush1.xpose.msra.mxu0 0.0
    %1151 = vmatprep.subr.mxu0 0.0
    %1152 = vmatpush1.xpose.msra.mxu0 0.0
    %1153 = vmatprep.subr.mxu0 0.0
    %1154 = vmatpush1.xpose.msra.mxu0 0.0
    %1155 = vmatprep.subr.mxu0 0.0
    %1156 = vmatpush1.xpose.msra.mxu0 0.0
    %1157 = vmatprep.subr.mxu0 0.0
    %1158 = vmatpush1.xpose.msra.mxu0 0.0
    %1159 = vmatprep.mubr.f32.mxu0 0.0
    %v1160 = vand.u32 %v52, 4294901760
    %1161 = vmatmul.mubr.f32.gmra.mrb[0].mxu0 %v1160
    %v1162 = vpop.f32.mrb[0].mxu0
    %v1163 = vadd.f32 %v924, %v1162
    %v1164 = vpop.f32.mrb[0].mxu0
    %1165 = vmatprep.mubr.f32.mxu0 0.0
    %v1166 = vand.u32 %v55, 4294901760
    %1167 = vmatmul.mubr.f32.gmra.mrb[0].mxu0 %v1166
    %v1168 = vpop.f32.mrb[0].mxu0
    %v1169 = vadd.f32 %v932, %v1168
    %v1170 = vpop.f32.mrb[0].mxu0
    %1171 = vmatprep.mubr.f32.mxu0 0.0
    %v1172 = vand.u32 %v58, 4294901760
    %1173 = vmatmul.mubr.f32.gmra.mrb[0].mxu0 %v1172
    %v1174 = vpop.f32.mrb[0].mxu0
    %v1175 = vadd.f32 %v940, %v1174
    %v1176 = vpop.f32.mrb[0].mxu0
    %1177 = vmatprep.mubr.f32.mxu0 0.0
    %v1178 = vand.u32 %v61, 4294901760
    %1179 = vmatmul.mubr.f32.gmra.mrb[0].mxu0 %v1178
    %v1180 = vpop.f32.mrb[0].mxu0
    %v1181 = vadd.f32 %v948, %v1180
    %v1182 = vpop.f32.mrb[0].mxu0
    %1183 = vmatprep.mubr.f32.mxu0 0.0
    %v1184 = vand.u32 %v64, 4294901760
    %1185 = vmatmul.mubr.f32.gmra.mrb[0].mxu0 %v1184
    %v1186 = vpop.f32.mrb[0].mxu0
    %v1187 = vadd.f32 %v956, %v1186
    %v1188 = vpop.f32.mrb[0].mxu0
    %1189 = vmatprep.mubr.f32.mxu0 0.0
    %v1190 = vand.u32 %v67, 4294901760
    %1191 = vmatmul.mubr.f32.gmra.mrb[0].mxu0 %v1190
    %v1192 = vpop.f32.mrb[0].mxu0
    %v1193 = vadd.f32 %v964, %v1192
    %v1194 = vpop.f32.mrb[0].mxu0
    %1195 = vmatprep.mubr.f32.mxu0 0.0
    %v1196 = vand.u32 %v70, 4294901760
    %1197 = vmatmul.mubr.f32.gmra.mrb[0].mxu0 %v1196
    %v1198 = vpop.f32.mrb[0].mxu0
    %v1199 = vadd.f32 %v972, %v1198
    %v1200 = vpop.f32.mrb[0].mxu0
    %1201 = vmatprep.mubr.f32.mxu0 0.0
    %v1202 = vand.u32 %v73, 4294901760
    %1203 = vmatmul.mubr.f32.gmra.mrb[0].mxu0 %v1202
    %v1204 = vpop.f32.mrb[0].mxu0
    %v1205 = vadd.f32 %v980, %v1204
    %v1206 = vpop.f32.mrb[0].mxu0
    %1207 = vmatprep.mubr.f32.mxu0 0.0
    %v1208 = vand.u32 %v76, 4294901760
    %1209 = vmatmul.mubr.f32.gmra.mrb[0].mxu0 %v1208
    %v1210 = vpop.f32.mrb[0].mxu0
    %v1211 = vadd.f32 %v988, %v1210
    %v1212 = vpop.f32.mrb[0].mxu0
    %1213 = vmatprep.mubr.f32.mxu0 0.0
    %v1214 = vand.u32 %v79, 4294901760
    %1215 = vmatmul.mubr.f32.gmra.mrb[0].mxu0 %v1214
    %v1216 = vpop.f32.mrb[0].mxu0
    %v1217 = vadd.f32 %v996, %v1216
    %v1218 = vpop.f32.mrb[0].mxu0
    %1219 = vmatprep.mubr.f32.mxu0 0.0
    %v1220 = vand.u32 %v82, 4294901760
    %1221 = vmatmul.mubr.f32.gmra.mrb[0].mxu0 %v1220
    %v1222 = vpop.f32.mrb[0].mxu0
    %v1223 = vadd.f32 %v1004, %v1222
    %v1224 = vpop.f32.mrb[0].mxu0
    %1225 = vmatprep.mubr.f32.mxu0 0.0
    %v1226 = vand.u32 %v85, 4294901760
    %1227 = vmatmul.mubr.f32.gmra.mrb[0].mxu0 %v1226
    %v1228 = vpop.f32.mrb[0].mxu0
    %v1229 = vadd.f32 %v1012, %v1228
    %v1230 = vpop.f32.mrb[0].mxu0
    %1231 = vmatprep.mubr.f32.mxu0 0.0
    %v1232 = vand.u32 %v88, 4294901760
    %1233 = vmatmul.mubr.f32.gmra.mrb[0].mxu0 %v1232
    %v1234 = vpop.f32.mrb[0].mxu0
    %v1235 = vadd.f32 %v1020, %v1234
    %v1236 = vpop.f32.mrb[0].mxu0
    %1237 = vmatprep.mubr.f32.mxu0 0.0
    %v1238 = vand.u32 %v91, 4294901760
    %1239 = vmatmul.mubr.f32.gmra.mrb[0].mxu0 %v1238
    %v1240 = vpop.f32.mrb[0].mxu0
    %v1241 = vadd.f32 %v1028, %v1240
    %v1242 = vpop.f32.mrb[0].mxu0
    %1243 = vmatprep.mubr.f32.mxu0 0.0
    %v1244 = vand.u32 %v94, 4294901760
    %1245 = vmatmul.mubr.f32.gmra.mrb[0].mxu0 %v1244
    %v1246 = vpop.f32.mrb[0].mxu0
    %v1247 = vadd.f32 %v1036, %v1246
    %v1248 = vpop.f32.mrb[0].mxu0
    %1249 = vmatprep.mubr.f32.mxu0 0.0
    %v1250 = vand.u32 %v97, 4294901760
    %1251 = vmatmul.mubr.f32.gmra.mrb[0].mxu0 %v1250
    %v1252 = vpop.f32.mrb[0].mxu0
    %v1253 = vadd.f32 %v1044, %v1252
    %v1254 = vpop.f32.mrb[0].mxu0
    %1255 = vdwg.mxu0
    %1256 = vmatprep.subr.mxu0 0.0
    %v1257 = vand.u32 %v100, 4294901760
    %1258 = vmatpush1.xpose.msra.mxu0 %v1257
    %1259 = vmatprep.subr.mxu0 0.0
    %v1260 = vand.u32 %v103, 4294901760
    %1261 = vmatpush1.xpose.msra.mxu0 %v1260
    %1262 = vmatprep.subr.mxu0 0.0
    %v1263 = vand.u32 %v106, 4294901760
    %1264 = vmatpush1.xpose.msra.mxu0 %v1263
    %1265 = vmatprep.subr.mxu0 0.0
    %v1266 = vand.u32 %v109, 4294901760
    %1267 = vmatpush1.xpose.msra.mxu0 %v1266
    %1268 = vmatprep.subr.mxu0 0.0
    %v1269 = vand.u32 %v112, 4294901760
    %1270 = vmatpush1.xpose.msra.mxu0 %v1269
    %1271 = vmatprep.subr.mxu0 0.0
    %v1272 = vand.u32 %v115, 4294901760
    %1273 = vmatpush1.xpose.msra.mxu0 %v1272
    %1274 = vmatprep.subr.mxu0 0.0
    %v1275 = vand.u32 %v118, 4294901760
    %1276 = vmatpush1.xpose.msra.mxu0 %v1275
    %1277 = vmatprep.subr.mxu0 0.0
    %v1278 = vand.u32 %v121, 4294901760
    %1279 = vmatpush1.xpose.msra.mxu0 %v1278
    %1280 = vmatprep.subr.mxu0 0.0
    %v1281 = vand.u32 %v124, 4294901760
    %1282 = vmatpush1.xpose.msra.mxu0 %v1281
    %1283 = vmatprep.subr.mxu0 0.0
    %v1284 = vand.u32 %v127, 4294901760
    %1285 = vmatpush1.xpose.msra.mxu0 %v1284
    %1286 = vmatprep.subr.mxu0 0.0
    %v1287 = vand.u32 %v130, 4294901760
    %1288 = vmatpush1.xpose.msra.mxu0 %v1287
    %1289 = vmatprep.subr.mxu0 0.0
    %v1290 = vand.u32 %v133, 4294901760
    %1291 = vmatpush1.xpose.msra.mxu0 %v1290
    %1292 = vmatprep.subr.mxu0 0.0
    %v1293 = vand.u32 %v136, 4294901760
    %1294 = vmatpush1.xpose.msra.mxu0 %v1293
    %1295 = vmatprep.subr.mxu0 0.0
    %v1296 = vand.u32 %v139, 4294901760
    %1297 = vmatpush1.xpose.msra.mxu0 %v1296
    %1298 = vmatprep.subr.mxu0 0.0
    %v1299 = vand.u32 %v142, 4294901760
    %1300 = vmatpush1.xpose.msra.mxu0 %v1299
    %1301 = vmatprep.subr.mxu0 0.0
    %v1302 = vand.u32 %v145, 4294901760
    %1303 = vmatpush1.xpose.msra.mxu0 %v1302
    %1304 = vmatprep.subr.mxu0 0.0
    %1305 = vmatpush1.xpose.msra.mxu0 0.0
    %1306 = vmatprep.subr.mxu0 0.0
    %1307 = vmatpush1.xpose.msra.mxu0 0.0
    %1308 = vmatprep.subr.mxu0 0.0
    %1309 = vmatpush1.xpose.msra.mxu0 0.0
    %1310 = vmatprep.subr.mxu0 0.0
    %1311 = vmatpush1.xpose.msra.mxu0 0.0
    %1312 = vmatprep.subr.mxu0 0.0
    %1313 = vmatpush1.xpose.msra.mxu0 0.0
    %1314 = vmatprep.subr.mxu0 0.0
    %1315 = vmatpush1.xpose.msra.mxu0 0.0
    %1316 = vmatprep.subr.mxu0 0.0
    %1317 = vmatpush1.xpose.msra.mxu0 0.0
    %1318 = vmatprep.subr.mxu0 0.0
    %1319 = vmatpush1.xpose.msra.mxu0 0.0
    %1320 = vmatprep.subr.mxu0 0.0
    %1321 = vmatpush1.xpose.msra.mxu0 0.0
    %1322 = vmatprep.subr.mxu0 0.0
    %1323 = vmatpush1.xpose.msra.mxu0 0.0
    %1324 = vmatprep.subr.mxu0 0.0
    %1325 = vmatpush1.xpose.msra.mxu0 0.0
    %1326 = vmatprep.subr.mxu0 0.0
    %1327 = vmatpush1.xpose.msra.mxu0 0.0
    %1328 = vmatprep.subr.mxu0 0.0
    %1329 = vmatpush1.xpose.msra.mxu0 0.0
    %1330 = vmatprep.subr.mxu0 0.0
    %1331 = vmatpush1.xpose.msra.mxu0 0.0
    %1332 = vmatprep.subr.mxu0 0.0
    %1333 = vmatpush1.xpose.msra.mxu0 0.0
    %1334 = vmatprep.subr.mxu0 0.0
    %1335 = vmatpush1.xpose.msra.mxu0 0.0
    %1336 = vmatprep.mubr.f32.mxu0 0.0
    %v1337 = vand.u32 %v52, 4294901760
    %1338 = vmatmul.mubr.f32.gmra.mrb[0].mxu0 %v1337
    %v1339 = vpop.f32.mrb[0].mxu0
    %v1340 = vadd.f32 %v1163, %v1339
    %v1341 = vpop.f32.mrb[0].mxu0
    %1342 = vmatprep.mubr.f32.mxu0 0.0
    %v1343 = vand.u32 %v55, 4294901760
    %1344 = vmatmul.mubr.f32.gmra.mrb[0].mxu0 %v1343
    %v1345 = vpop.f32.mrb[0].mxu0
    %v1346 = vadd.f32 %v1169, %v1345
    %v1347 = vpop.f32.mrb[0].mxu0
    %1348 = vmatprep.mubr.f32.mxu0 0.0
    %v1349 = vand.u32 %v58, 4294901760
    %1350 = vmatmul.mubr.f32.gmra.mrb[0].mxu0 %v1349
    %v1351 = vpop.f32.mrb[0].mxu0
    %v1352 = vadd.f32 %v1175, %v1351
    %v1353 = vpop.f32.mrb[0].mxu0
    %1354 = vmatprep.mubr.f32.mxu0 0.0
    %v1355 = vand.u32 %v61, 4294901760
    %1356 = vmatmul.mubr.f32.gmra.mrb[0].mxu0 %v1355
    %v1357 = vpop.f32.mrb[0].mxu0
    %v1358 = vadd.f32 %v1181, %v1357
    %v1359 = vpop.f32.mrb[0].mxu0
    %1360 = vmatprep.mubr.f32.mxu0 0.0
    %v1361 = vand.u32 %v64, 4294901760
    %1362 = vmatmul.mubr.f32.gmra.mrb[0].mxu0 %v1361
    %v1363 = vpop.f32.mrb[0].mxu0
    %v1364 = vadd.f32 %v1187, %v1363
    %v1365 = vpop.f32.mrb[0].mxu0
    %1366 = vmatprep.mubr.f32.mxu0 0.0
    %v1367 = vand.u32 %v67, 4294901760
    %1368 = vmatmul.mubr.f32.gmra.mrb[0].mxu0 %v1367
    %v1369 = vpop.f32.mrb[0].mxu0
    %v1370 = vadd.f32 %v1193, %v1369
    %v1371 = vpop.f32.mrb[0].mxu0
    %1372 = vmatprep.mubr.f32.mxu0 0.0
    %v1373 = vand.u32 %v70, 4294901760
    %1374 = vmatmul.mubr.f32.gmra.mrb[0].mxu0 %v1373
    %v1375 = vpop.f32.mrb[0].mxu0
    %v1376 = vadd.f32 %v1199, %v1375
    %v1377 = vpop.f32.mrb[0].mxu0
    %1378 = vmatprep.mubr.f32.mxu0 0.0
    %v1379 = vand.u32 %v73, 4294901760
    %1380 = vmatmul.mubr.f32.gmra.mrb[0].mxu0 %v1379
    %v1381 = vpop.f32.mrb[0].mxu0
    %v1382 = vadd.f32 %v1205, %v1381
    %v1383 = vpop.f32.mrb[0].mxu0
    %1384 = vmatprep.mubr.f32.mxu0 0.0
    %v1385 = vand.u32 %v76, 4294901760
    %1386 = vmatmul.mubr.f32.gmra.mrb[0].mxu0 %v1385
    %v1387 = vpop.f32.mrb[0].mxu0
    %v1388 = vadd.f32 %v1211, %v1387
    %v1389 = vpop.f32.mrb[0].mxu0
    %1390 = vmatprep.mubr.f32.mxu0 0.0
    %v1391 = vand.u32 %v79, 4294901760
    %1392 = vmatmul.mubr.f32.gmra.mrb[0].mxu0 %v1391
    %v1393 = vpop.f32.mrb[0].mxu0
    %v1394 = vadd.f32 %v1217, %v1393
    %v1395 = vpop.f32.mrb[0].mxu0
    %1396 = vmatprep.mubr.f32.mxu0 0.0
    %v1397 = vand.u32 %v82, 4294901760
    %1398 = vmatmul.mubr.f32.gmra.mrb[0].mxu0 %v1397
    %v1399 = vpop.f32.mrb[0].mxu0
    %v1400 = vadd.f32 %v1223, %v1399
    %v1401 = vpop.f32.mrb[0].mxu0
    %1402 = vmatprep.mubr.f32.mxu0 0.0
    %v1403 = vand.u32 %v85, 4294901760
    %1404 = vmatmul.mubr.f32.gmra.mrb[0].mxu0 %v1403
    %v1405 = vpop.f32.mrb[0].mxu0
    %v1406 = vadd.f32 %v1229, %v1405
    %v1407 = vpop.f32.mrb[0].mxu0
    %1408 = vmatprep.mubr.f32.mxu0 0.0
    %v1409 = vand.u32 %v88, 4294901760
    %1410 = vmatmul.mubr.f32.gmra.mrb[0].mxu0 %v1409
    %v1411 = vpop.f32.mrb[0].mxu0
    %v1412 = vadd.f32 %v1235, %v1411
    %v1413 = vpop.f32.mrb[0].mxu0
    %1414 = vmatprep.mubr.f32.mxu0 0.0
    %v1415 = vand.u32 %v91, 4294901760
    %1416 = vmatmul.mubr.f32.gmra.mrb[0].mxu0 %v1415
    %v1417 = vpop.f32.mrb[0].mxu0
    %v1418 = vadd.f32 %v1241, %v1417
    %v1419 = vpop.f32.mrb[0].mxu0
    %1420 = vmatprep.mubr.f32.mxu0 0.0
    %v1421 = vand.u32 %v94, 4294901760
    %1422 = vmatmul.mubr.f32.gmra.mrb[0].mxu0 %v1421
    %v1423 = vpop.f32.mrb[0].mxu0
    %v1424 = vadd.f32 %v1247, %v1423
    %v1425 = vpop.f32.mrb[0].mxu0
    %1426 = vmatprep.mubr.f32.mxu0 0.0
    %v1427 = vand.u32 %v97, 4294901760
    %1428 = vmatmul.mubr.f32.gmra.mrb[0].mxu0 %v1427
    %v1429 = vpop.f32.mrb[0].mxu0
    %v1430 = vadd.f32 %v1253, %v1429
    %v1431 = vpop.f32.mrb[0].mxu0
    %1432 = vdwg.mxu0
    %v1433 = vld [vmem:[%s2] sm:$0xff]
    %v1434 = vld [vmem:[%s2 + $0x8] sm:$0xff]
    %v1435 = vld [vmem:[%s2 + $0x10] sm:$0xff]
    %v1436 = vld [vmem:[%s2 + $0x18] sm:$0xff]
    %v1437 = vld [vmem:[%s2 + $0x20] sm:$0xff]
    %v1438 = vld [vmem:[%s2 + $0x28] sm:$0xff]
    %v1439 = vld [vmem:[%s2 + $0x30] sm:$0xff]
    %v1440 = vld [vmem:[%s2 + $0x38] sm:$0xff]
    %v1441 = vld [vmem:[%s2 + $0x40] sm:$0xff]
    %v1442 = vld [vmem:[%s2 + $0x48] sm:$0xff]
    %v1443 = vld [vmem:[%s2 + $0x50] sm:$0xff]
    %v1444 = vld [vmem:[%s2 + $0x58] sm:$0xff]
    %v1445 = vld [vmem:[%s2 + $0x60] sm:$0xff]
    %v1446 = vld [vmem:[%s2 + $0x68] sm:$0xff]
    %v1447 = vld [vmem:[%s2 + $0x70] sm:$0xff]
    %v1448 = vld [vmem:[%s2 + $0x78] sm:$0xff]
    %v1449 = vld [vmem:[%s3] sm:$0x1]
    %1451 = vset.pattern.permute.xlu0 0
    %1452 = vperm.xlu0 %1451, %v1433
    %v1453 = vpop.permute.xlu0 %1452
    %1456 = vset.pattern.permute.xlu0 0
    %1457 = vperm.xlu0 %1456, %v1434
    %v1458 = vpop.permute.xlu0 %1457
    %1461 = vset.pattern.permute.xlu0 0
    %1462 = vperm.xlu0 %1461, %v1435
    %v1463 = vpop.permute.xlu0 %1462
    %1466 = vset.pattern.permute.xlu0 0
    %1467 = vperm.xlu0 %1466, %v1436
    %v1468 = vpop.permute.xlu0 %1467
    %1471 = vset.pattern.permute.xlu0 0
    %1472 = vperm.xlu0 %1471, %v1437
    %v1473 = vpop.permute.xlu0 %1472
    %1476 = vset.pattern.permute.xlu0 0
    %1477 = vperm.xlu0 %1476, %v1438
    %v1478 = vpop.permute.xlu0 %1477
    %1481 = vset.pattern.permute.xlu0 0
    %1482 = vperm.xlu0 %1481, %v1439
    %v1483 = vpop.permute.xlu0 %1482
    %1486 = vset.pattern.permute.xlu0 0
    %1487 = vperm.xlu0 %1486, %v1440
    %v1488 = vpop.permute.xlu0 %1487
    %1491 = vset.pattern.permute.xlu0 0
    %1492 = vperm.xlu0 %1491, %v1441
    %v1493 = vpop.permute.xlu0 %1492
    %1496 = vset.pattern.permute.xlu0 0
    %1497 = vperm.xlu0 %1496, %v1442
    %v1498 = vpop.permute.xlu0 %1497
    %1501 = vset.pattern.permute.xlu0 0
    %1502 = vperm.xlu0 %1501, %v1443
    %v1503 = vpop.permute.xlu0 %1502
    %1506 = vset.pattern.permute.xlu0 0
    %1507 = vperm.xlu0 %1506, %v1444
    %v1508 = vpop.permute.xlu0 %1507
    %1511 = vset.pattern.permute.xlu0 0
    %1512 = vperm.xlu0 %1511, %v1445
    %v1513 = vpop.permute.xlu0 %1512
    %1516 = vset.pattern.permute.xlu0 0
    %1517 = vperm.xlu0 %1516, %v1446
    %v1518 = vpop.permute.xlu0 %1517
    %1521 = vset.pattern.permute.xlu0 0
    %1522 = vperm.xlu0 %1521, %v1447
    %v1523 = vpop.permute.xlu0 %1522
    %1526 = vset.pattern.permute.xlu0 0
    %1527 = vperm.xlu0 %1526, %v1448
    %v1528 = vpop.permute.xlu0 %1527
    %v1531 = vlaneseq
    %v1532 = vshrl.u32 %v1531, 7
    %v1533 = vsub.s32 0, %v1532
    %v1534 = vrot.slane %v1449, %v1533
    %v1536 = vadd.f32 %v1453, %v1534
    %v1537 = vadd.f32 %v1458, %v1534
    %v1538 = vadd.f32 %v1463, %v1534
    %v1539 = vadd.f32 %v1468, %v1534
    %v1540 = vadd.f32 %v1473, %v1534
    %v1541 = vadd.f32 %v1478, %v1534
    %v1542 = vadd.f32 %v1483, %v1534
    %v1543 = vadd.f32 %v1488, %v1534
    %v1544 = vadd.f32 %v1493, %v1534
    %v1545 = vadd.f32 %v1498, %v1534
    %v1546 = vadd.f32 %v1503, %v1534
    %v1547 = vadd.f32 %v1508, %v1534
    %v1548 = vadd.f32 %v1513, %v1534
    %v1549 = vadd.f32 %v1518, %v1534
    %v1550 = vadd.f32 %v1523, %v1534
    %v1551 = vadd.f32 %v1528, %v1534
    %v1552 = vmul.f32 %v1340, 2.0
    %v1553 = vmul.f32 %v1346, 2.0
    %v1554 = vmul.f32 %v1352, 2.0
    %v1555 = vmul.f32 %v1358, 2.0
    %v1556 = vmul.f32 %v1364, 2.0
    %v1557 = vmul.f32 %v1370, 2.0
    %v1558 = vmul.f32 %v1376, 2.0
    %v1559 = vmul.f32 %v1382, 2.0
    %v1560 = vmul.f32 %v1388, 2.0
    %v1561 = vmul.f32 %v1394, 2.0
    %v1562 = vmul.f32 %v1400, 2.0
    %v1563 = vmul.f32 %v1406, 2.0
    %v1564 = vmul.f32 %v1412, 2.0
    %v1565 = vmul.f32 %v1418, 2.0
    %v1566 = vmul.f32 %v1424, 2.0
    %v1567 = vmul.f32 %v1430, 2.0
    %v1568 = vsub.f32 %v1536, %v1552
    %v1569 = vsub.f32 %v1537, %v1553
    %v1570 = vsub.f32 %v1538, %v1554
    %v1571 = vsub.f32 %v1539, %v1555
    %v1572 = vsub.f32 %v1540, %v1556
    %v1573 = vsub.f32 %v1541, %v1557
    %v1574 = vsub.f32 %v1542, %v1558
    %v1575 = vsub.f32 %v1543, %v1559
    %v1576 = vsub.f32 %v1544, %v1560
    %v1577 = vsub.f32 %v1545, %v1561
    %v1578 = vsub.f32 %v1546, %v1562
    %v1579 = vsub.f32 %v1547, %v1563
    %v1580 = vsub.f32 %v1548, %v1564
    %v1581 = vsub.f32 %v1549, %v1565
    %v1582 = vsub.f32 %v1550, %v1566
    %v1583 = vsub.f32 %v1551, %v1567
    %v1584 = vmax.f32 %v1568, 0.0
    %v1585 = vmax.f32 %v1569, 0.0
    %v1586 = vmax.f32 %v1570, 0.0
    %v1587 = vmax.f32 %v1571, 0.0
    %v1588 = vmax.f32 %v1572, 0.0
    %v1589 = vmax.f32 %v1573, 0.0
    %v1590 = vmax.f32 %v1574, 0.0
    %v1591 = vmax.f32 %v1575, 0.0
    %v1592 = vmax.f32 %v1576, 0.0
    %v1593 = vmax.f32 %v1577, 0.0
    %v1594 = vmax.f32 %v1578, 0.0
    %v1595 = vmax.f32 %v1579, 0.0
    %v1596 = vmax.f32 %v1580, 0.0
    %v1597 = vmax.f32 %v1581, 0.0
    %v1598 = vmax.f32 %v1582, 0.0
    %v1599 = vmax.f32 %v1583, 0.0
    %v1600 = vmul.f32 %v1584, 10.0
    %v1601 = vmul.f32 %v1585, 10.0
    %v1602 = vmul.f32 %v1586, 10.0
    %v1603 = vmul.f32 %v1587, 10.0
    %v1604 = vmul.f32 %v1588, 10.0
    %v1605 = vmul.f32 %v1589, 10.0
    %v1606 = vmul.f32 %v1590, 10.0
    %v1607 = vmul.f32 %v1591, 10.0
    %v1608 = vmul.f32 %v1592, 10.0
    %v1609 = vmul.f32 %v1593, 10.0
    %v1610 = vmul.f32 %v1594, 10.0
    %v1611 = vmul.f32 %v1595, 10.0
    %v1612 = vmul.f32 %v1596, 10.0
    %v1613 = vmul.f32 %v1597, 10.0
    %v1614 = vmul.f32 %v1598, 10.0
    %v1615 = vmul.f32 %v1599, 10.0
    %v1616 = vadd.f32 %v1600, -1.0
    %v1617 = vadd.f32 %v1601, -1.0
    %v1618 = vadd.f32 %v1602, -1.0
    %v1619 = vadd.f32 %v1603, -1.0
    %v1620 = vadd.f32 %v1604, -1.0
    %v1621 = vadd.f32 %v1605, -1.0
    %v1622 = vadd.f32 %v1606, -1.0
    %v1623 = vadd.f32 %v1607, -1.0
    %v1624 = vadd.f32 %v1608, -1.0
    %v1625 = vadd.f32 %v1609, -1.0
    %v1626 = vadd.f32 %v1610, -1.0
    %v1627 = vadd.f32 %v1611, -1.0
    %v1628 = vadd.f32 %v1612, -1.0
    %v1629 = vadd.f32 %v1613, -1.0
    %v1630 = vadd.f32 %v1614, -1.0
    %v1631 = vadd.f32 %v1615, -1.0
    %v1632 = vmul.f32 %v1616, 0.5
    %v1633 = vmul.f32 %v1617, 0.5
    %v1634 = vmul.f32 %v1618, 0.5
    %v1635 = vmul.f32 %v1619, 0.5
    %v1636 = vmul.f32 %v1620, 0.5
    %v1637 = vmul.f32 %v1621, 0.5
    %v1638 = vmul.f32 %v1622, 0.5
    %v1639 = vmul.f32 %v1623, 0.5
    %v1640 = vmul.f32 %v1624, 0.5
    %v1641 = vmul.f32 %v1625, 0.5
    %v1642 = vmul.f32 %v1626, 0.5
    %v1643 = vmul.f32 %v1627, 0.5
    %v1644 = vmul.f32 %v1628, 0.5
    %v1645 = vmul.f32 %v1629, 0.5
    %v1646 = vmul.f32 %v1630, 0.5
    %v1647 = vmul.f32 %v1631, 0.5
    %v1648 = vtanh.pop %v1632
    %v1649 = vtanh.pop %v1633
    %v1650 = vtanh.pop %v1634
    %v1651 = vtanh.pop %v1635
    %v1652 = vtanh.pop %v1636
    %v1653 = vtanh.pop %v1637
    %v1654 = vtanh.pop %v1638
    %v1655 = vtanh.pop %v1639
    %v1656 = vtanh.pop %v1640
    %v1657 = vtanh.pop %v1641
    %v1658 = vtanh.pop %v1642
    %v1659 = vtanh.pop %v1643
    %v1660 = vtanh.pop %v1644
    %v1661 = vtanh.pop %v1645
    %v1662 = vtanh.pop %v1646
    %v1663 = vtanh.pop %v1647
    %v1664 = vadd.f32 %v1648, 1.0
    %v1665 = vadd.f32 %v1649, 1.0
    %v1666 = vadd.f32 %v1650, 1.0
    %v1667 = vadd.f32 %v1651, 1.0
    %v1668 = vadd.f32 %v1652, 1.0
    %v1669 = vadd.f32 %v1653, 1.0
    %v1670 = vadd.f32 %v1654, 1.0
    %v1671 = vadd.f32 %v1655, 1.0
    %v1672 = vadd.f32 %v1656, 1.0
    %v1673 = vadd.f32 %v1657, 1.0
    %v1674 = vadd.f32 %v1658, 1.0
    %v1675 = vadd.f32 %v1659, 1.0
    %v1676 = vadd.f32 %v1660, 1.0
    %v1677 = vadd.f32 %v1661, 1.0
    %v1678 = vadd.f32 %v1662, 1.0
    %v1679 = vadd.f32 %v1663, 1.0
    %v1680 = vmul.f32 %v1664, 0.5
    %v1681 = vmul.f32 %v1665, 0.5
    %v1682 = vmul.f32 %v1666, 0.5
    %v1683 = vmul.f32 %v1667, 0.5
    %v1684 = vmul.f32 %v1668, 0.5
    %v1685 = vmul.f32 %v1669, 0.5
    %v1686 = vmul.f32 %v1670, 0.5
    %v1687 = vmul.f32 %v1671, 0.5
    %v1688 = vmul.f32 %v1672, 0.5
    %v1689 = vmul.f32 %v1673, 0.5
    %v1690 = vmul.f32 %v1674, 0.5
    %v1691 = vmul.f32 %v1675, 0.5
    %v1692 = vmul.f32 %v1676, 0.5
    %v1693 = vmul.f32 %v1677, 0.5
    %v1694 = vmul.f32 %v1678, 0.5
    %v1695 = vmul.f32 %v1679, 0.5
    %1696 = vst [vmem:[#allocation2] sm:$0xff] %v1680
    %1697 = vst [vmem:[#allocation2 + $0x8] sm:$0xff] %v1681
    %1698 = vst [vmem:[#allocation2 + $0x10] sm:$0xff] %v1682
    %1699 = vst [vmem:[#allocation2 + $0x18] sm:$0xff] %v1683
    %1700 = vst [vmem:[#allocation2 + $0x20] sm:$0xff] %v1684
    %1701 = vst [vmem:[#allocation2 + $0x28] sm:$0xff] %v1685
    %1702 = vst [vmem:[#allocation2 + $0x30] sm:$0xff] %v1686
    %1703 = vst [vmem:[#allocation2 + $0x38] sm:$0xff] %v1687
    %1704 = vst [vmem:[#allocation2 + $0x40] sm:$0xff] %v1688
    %1705 = vst [vmem:[#allocation2 + $0x48] sm:$0xff] %v1689
    %1706 = vst [vmem:[#allocation2 + $0x50] sm:$0xff] %v1690
    %1707 = vst [vmem:[#allocation2 + $0x58] sm:$0xff] %v1691
    %1708 = vst [vmem:[#allocation2 + $0x60] sm:$0xff] %v1692
    %1709 = vst [vmem:[#allocation2 + $0x68] sm:$0xff] %v1693
    %1710 = vst [vmem:[#allocation2 + $0x70] sm:$0xff] %v1694
    %1711 = vst [vmem:[#allocation2 + $0x78] sm:$0xff] %v1695
    %p1712 = scmp.eq.s32.totalorder 0, 0
    // Predicated region
    $region18: #{tpu_custom_call.1} parent=1 // pred_check
      %p1713 = pneg %p1712
    $region19: #{tpu_custom_call.1} parent=1 // pred_check_branch
      %1715 = sbr.rel (%p1713) target = $region21
    $region20: #{tpu_custom_call.1} parent=1 // pred_region
      %v1716 = vlaneseq
      %v1717 = vshrl.u32 %v1716, 7
      %v1718 = vadd.s32 %v1717, 8
      %v1719 = vadd.s32 %v1717, 16
      %v1720 = vadd.s32 %v1717, 24
      %v1721 = vadd.s32 %v1717, 32
      %v1722 = vadd.s32 %v1717, 40
      %v1723 = vadd.s32 %v1717, 48
      %v1724 = vadd.s32 %v1717, 56
      %v1725 = vadd.s32 %v1717, 64
      %v1726 = vadd.s32 %v1717, 72
      %v1727 = vadd.s32 %v1717, 80
      %v1728 = vadd.s32 %v1717, 88
      %v1729 = vadd.s32 %v1717, 96
      %v1730 = vadd.s32 %v1717, 104
      %v1731 = vadd.s32 %v1717, 112
      %v1732 = vadd.s32 %v1717, 120
      %v1733 = vlaneseq
      %v1734 = vand.u32 %v1733, 127
      %vm1735 = vcmp.eq.s32.totalorder %v1717, %v1734
      %vm1736 = vcmp.eq.s32.totalorder %v1718, %v1734
      %vm1737 = vcmp.eq.s32.totalorder %v1719, %v1734
      %vm1738 = vcmp.eq.s32.totalorder %v1720, %v1734
      %vm1739 = vcmp.eq.s32.totalorder %v1721, %v1734
      %vm1740 = vcmp.eq.s32.totalorder %v1722, %v1734
      %vm1741 = vcmp.eq.s32.totalorder %v1723, %v1734
      %vm1742 = vcmp.eq.s32.totalorder %v1724, %v1734
      %vm1743 = vcmp.eq.s32.totalorder %v1725, %v1734
      %vm1744 = vcmp.eq.s32.totalorder %v1726, %v1734
      %vm1745 = vcmp.eq.s32.totalorder %v1727, %v1734
      %vm1746 = vcmp.eq.s32.totalorder %v1728, %v1734
      %vm1747 = vcmp.eq.s32.totalorder %v1729, %v1734
      %vm1748 = vcmp.eq.s32.totalorder %v1730, %v1734
      %vm1749 = vcmp.eq.s32.totalorder %v1731, %v1734
      %vm1750 = vcmp.eq.s32.totalorder %v1732, %v1734
      %v1751 = vsel %vm1735, 0.0, %v1680
      %v1752 = vsel %vm1736, 0.0, %v1681
      %v1753 = vsel %vm1737, 0.0, %v1682
      %v1754 = vsel %vm1738, 0.0, %v1683
      %v1755 = vsel %vm1739, 0.0, %v1684
      %v1756 = vsel %vm1740, 0.0, %v1685
      %v1757 = vsel %vm1741, 0.0, %v1686
      %v1758 = vsel %vm1742, 0.0, %v1687
      %v1759 = vsel %vm1743, 0.0, %v1688
      %v1760 = vsel %vm1744, 0.0, %v1689
      %v1761 = vsel %vm1745, 0.0, %v1690
      %v1762 = vsel %vm1746, 0.0, %v1691
      %v1763 = vsel %vm1747, 0.0, %v1692
      %v1764 = vsel %vm1748, 0.0, %v1693
      %v1765 = vsel %vm1749, 0.0, %v1694
      %v1766 = vsel %vm1750, 0.0, %v1695
      %1767 = vst [vmem:[#allocation2] sm:$0xff] %v1751
      %1768 = vst [vmem:[#allocation2 + $0x8] sm:$0xff] %v1752
      %1769 = vst [vmem:[#allocation2 + $0x10] sm:$0xff] %v1753
      %1770 = vst [vmem:[#allocation2 + $0x18] sm:$0xff] %v1754
      %1771 = vst [vmem:[#allocation2 + $0x20] sm:$0xff] %v1755
      %1772 = vst [vmem:[#allocation2 + $0x28] sm:$0xff] %v1756
      %1773 = vst [vmem:[#allocation2 + $0x30] sm:$0xff] %v1757
      %1774 = vst [vmem:[#allocation2 + $0x38] sm:$0xff] %v1758
      %1775 = vst [vmem:[#allocation2 + $0x40] sm:$0xff] %v1759
      %1776 = vst [vmem:[#allocation2 + $0x48] sm:$0xff] %v1760
      %1777 = vst [vmem:[#allocation2 + $0x50] sm:$0xff] %v1761
      %1778 = vst [vmem:[#allocation2 + $0x58] sm:$0xff] %v1762
      %1779 = vst [vmem:[#allocation2 + $0x60] sm:$0xff] %v1763
      %1780 = vst [vmem:[#allocation2 + $0x68] sm:$0xff] %v1764
      %1781 = vst [vmem:[#allocation2 + $0x70] sm:$0xff] %v1765
      %1782 = vst [vmem:[#allocation2 + $0x78] sm:$0xff] %v1766
    $region21: #{tpu_custom_call.1} parent=1 // pred_fallthru
      _
    // Predicated region
    $region22: #{tpu_custom_call.1} parent=1 // pred_check
      _
    $region23: #{tpu_custom_call.1} parent=1 // pred_check_branch
      %1784 = sbr.rel (0) target = $region25
    $region24: #{tpu_custom_call.1} parent=1 // pred_region
      %s1786 = ssub.s32 2048, 2048
      %1787 = vsyncadd [#allocation3], %s1786
      %s1788 = sshll.u32 [#allocation2], 4
      %s1789 = int_to_ptr.vmem [resolvable:$true] %s1788
      %1794 = dma.vmem_to_hbm [thread:$0]  %s1789, 2048, %s4, [#allocation3], 128, 128, 8
    $region25: #{tpu_custom_call.1} parent=1 // pred_fallthru
      _
    // Predicated region
    $region26: #{tpu_custom_call.1} parent=1 // pred_check
      _
    $region27: #{tpu_custom_call.1} parent=1 // pred_check_branch
      %1796 = sbr.rel (0) target = $region29
    $region28: #{tpu_custom_call.1} parent=1 // pred_region
      %1797 = dma.done [#allocation3], 2048
    $region29: #{tpu_custom_call.1} parent=1 // pred_fallthru
      _
    %1798 = vsyncpa [#allocation3], 1

</llo_original>
